<compile_context>
chip_gen: v5e
topology: v5e:2x2
jax: 0.10.0
libtpu: 0.0.40
codegen_flags: <defaults>
</compile_context>

<pallas_src>
import functools

import jax
import jax.numpy as jnp
from jax.experimental import pallas as pl
from jax.experimental.pallas import tpu as pltpu

LN_EPS = 1e-5          # PyTorch nn.LayerNorm default eps
_INV_SQRT2 = 0.7071067811865476

# rows of the per-layer packed small-vector table (coalesced DMA)
_R_LN1G, _R_LN1B, _R_BO, _R_LN2G, _R_LN2B, _R_B2, _R_B1 = range(7)
_VEC_ROWS = 8


def _round_up(x, m):
    return (x + m - 1) // m * m


# ----------------------------- in-kernel helpers -----------------------------
def _layernorm(x, g, b):
    mu = jnp.mean(x, axis=-1, keepdims=True)
    xc = x - mu
    var = jnp.mean(xc * xc, axis=-1, keepdims=True)
    return xc * jax.lax.rsqrt(var + LN_EPS) * g + b


def _erf(x):
    # Abramowitz & Stegun 7.1.26 polynomial (max abs err ~1.5e-7): matches the
    # exact erf-GELU of nn.GELU() at float32 working precision.
    p = 0.3275911
    a1, a2, a3, a4, a5 = (0.254829592, -0.284496736, 1.421413741,
                          -1.453152027, 1.061405429)
    s = jnp.where(x >= 0.0, 1.0, -1.0)
    ax = jnp.abs(x)
    t = 1.0 / (1.0 + p * ax)
    poly = ((((a5 * t + a4) * t + a3) * t + a2) * t + a1) * t
    return s * (1.0 - poly * jnp.exp(-ax * ax))


def _gelu(x):
    # nn.GELU() default = exact (erf) form
    return 0.5 * x * (1.0 + _erf(x * _INV_SQRT2))


# --------------------------------- fused kernel -------------------------------
def vit_fused_kernel(xp_ref, ew_ref, eb_ref, pos_ref, bias_ref,
                     wqkv_ref, wo_ref, w1_ref, w2_ref, vec_ref,
                     fmw_ref, fmb_ref, fmg_ref, fmbeta_ref, wc_ref, bc_ref,
                     o_ref, x_scr, *, heads, dim_head):
    l = pl.program_id(1)
    inner = heads * dim_head

    # ---- patch embedding + positional embedding (once per batch block) ----
    @pl.when(l == 0)
    def _():
        xp = xp_ref[...]                                          # (M, patch_dim) bf16
        x_scr[...] = (jnp.dot(xp, ew_ref[...], preferred_element_type=jnp.float32)
                      + eb_ref[...] + pos_ref[...])               # emb_dropout p=0 -> id

    x = x_scr[...]                                                # (M, dim) f32 resident
    m, d = x.shape
    mlp = w1_ref.shape[2]
    V = vec_ref[0]                                                # (8, VP) packed per-layer vectors

    # ---- PreNorm + multi-head self-attention + residual ----
    xn = _layernorm(x, V[_R_LN1G:_R_LN1G + 1, :d],
                    V[_R_LN1B:_R_LN1B + 1, :d]).astype(jnp.bfloat16)
    # fused QKV: one MXU pass (scale already folded into the q columns)
    qkv = jnp.dot(xn, wqkv_ref[0],
                  preferred_element_type=jnp.float32).astype(jnp.bfloat16)  # (M, 3*inner)
    # head split = static lane slices stacked on a leading (batch) head axis
    q = jnp.stack([qkv[:, h * dim_head:(h + 1) * dim_head]
                   for h in range(heads)], axis=0)                # (H, M, dh) bf16
    k = jnp.stack([qkv[:, inner + h * dim_head: inner + (h + 1) * dim_head]
                   for h in range(heads)], axis=0)
    v = jnp.stack([qkv[:, 2 * inner + h * dim_head: 2 * inner + (h + 1) * dim_head]
                   for h in range(heads)], axis=0)
    dots = jax.lax.dot_general(q, k, (((2,), (2,)), ((0,), (0,))),
                               preferred_element_type=jnp.float32)          # (H, M, M)
    dots = dots + bias_ref[...]                   # block-diag mask: no cross-batch mixing
    dots = dots - jnp.max(dots, axis=-1, keepdims=True)
    e = jnp.exp(dots)
    attn = e * pl.reciprocal(jnp.sum(e, axis=-1, keepdims=True), approx=True)
    o_h = jax.lax.dot_general(attn.astype(jnp.bfloat16), v,
                              (((2,), (1,)), ((0,), (0,))),
                              preferred_element_type=jnp.float32)           # (H, M, dh)
    # concat heads along lanes -> one (M, inner) @ (inner, dim) output projection
    o_c = jnp.concatenate([o_h[h] for h in range(heads)], axis=-1).astype(jnp.bfloat16)
    x = (x + jnp.dot(o_c, wo_ref[0], preferred_element_type=jnp.float32)
         + V[_R_BO:_R_BO + 1, :d])

    # ---- PreNorm + FeedForward (Linear -> GELU -> Linear) + residual ----
    xn2 = _layernorm(x, V[_R_LN2G:_R_LN2G + 1, :d],
                     V[_R_LN2B:_R_LN2B + 1, :d]).astype(jnp.bfloat16)
    h1 = (jnp.dot(xn2, w1_ref[0], preferred_element_type=jnp.float32)
          + V[_R_B1:_R_B1 + 1, :mlp])
    h1 = _gelu(h1).astype(jnp.bfloat16)
    x = (x + jnp.dot(h1, w2_ref[0], preferred_element_type=jnp.float32)
         + V[_R_B2:_R_B2 + 1, :d])
    x_scr[...] = x

    # ---- feature-mapping head (only after the last transformer layer) ----
    @pl.when(l == pl.num_programs(1) - 1)
    def _():
        y = (jnp.dot(x.astype(jnp.bfloat16), fmw_ref[...],
                     preferred_element_type=jnp.float32) + fmb_ref[...])
        y = _layernorm(y, fmg_ref[...], fmbeta_ref[...])
        # 1x1 Conv2d expressed as block-diagonal matmul kron(I, Wc^T); equal to
        # view(B,H,W,-1) -> permute NCHW -> Conv2d(C, C, (1,1)).
        o_ref[...] = (jnp.dot(y.astype(jnp.bfloat16), wc_ref[...],
                              preferred_element_type=jnp.float32) + bc_ref[...])


# ------------------------------- parameters -----------------------------------
def init_params(key, *, image_size, patch_num, dim, depth, heads, dim_head,
                mlp_dim, channels):
    p = image_size // patch_num
    patch_dim = channels * p * p
    inner = heads * dim_head
    n_tokens = patch_num ** 2
    fm_dim = channels * p * p                     # in_channel * patch_size**2

    keys = iter(jax.random.split(key, 8 + depth * 8))

    def w(shape, s=0.05):
        return s * jax.random.normal(next(keys), shape, dtype=jnp.float32)

    params = {
        "embed_w": w((patch_dim, dim)),           # x @ W convention (torch weight.T)
        "embed_b": w((1, dim), 0.02),
        "pos": jax.random.normal(next(keys), (n_tokens, dim), dtype=jnp.float32),
        "layers": [],
        "fm_w": w((dim, fm_dim)),
        "fm_b": w((1, fm_dim), 0.02),
        "fm_ln_g": jnp.ones((1, fm_dim), jnp.float32),
        "fm_ln_b": jnp.zeros((1, fm_dim), jnp.float32),
        # Conv2d(C, C, (1,1)) weight squeezed to (C_out, C_in) and its bias
        "conv_w": w((channels, channels)),
        "conv_b": w((channels,), 0.02),
    }
    for _ in range(depth):
        params["layers"].append({
            "ln1_g": jnp.ones((dim,), jnp.float32),
            "ln1_b": jnp.zeros((dim,), jnp.float32),
            "wqkv": w((dim, 3 * inner)),          # to_qkv (no bias), [q|k|v], head-major
            "wo": w((inner, dim)),
            "bo": w((dim,), 0.02),
            "ln2_g": jnp.ones((dim,), jnp.float32),
            "ln2_b": jnp.zeros((dim,), jnp.float32),
            "w1": w((dim, mlp_dim)),
            "b1": w((mlp_dim,), 0.02),
            "w2": w((mlp_dim, dim)),
            "b2": w((dim,), 0.02),
        })
    return params


def pack_params(params, *, heads, dim_head, channels):
    """One-time packing: stack per-layer weights over depth, fuse q/k/v, fold the
    attention scale into Wq, coalesce the tiny per-layer vectors into one padded
    (depth, 8, VP) table, pre-cast matmul weights to bf16 and build the
    block-diagonal 1x1-conv weight."""
    depth = len(params["layers"])
    dim = params["embed_w"].shape[1]
    inner = heads * dim_head
    mlp_dim = params["layers"][0]["w1"].shape[1]
    fm_dim = params["fm_w"].shape[1]
    groups = fm_dim // channels
    scale = float(dim_head) ** -0.5
    vp = _round_up(max(dim, mlp_dim), 128)        # lane-padded vector-table width

    def stack(name):
        return jnp.stack([lp[name] for lp in params["layers"]], axis=0)

    wqkv = stack("wqkv")                                          # (depth, dim, 3*inner)
    wqkv = wqkv.at[:, :, :inner].multiply(scale)                  # fold attn scale into Wq

    vecs = jnp.zeros((depth, _VEC_ROWS, vp), jnp.float32)
    vecs = vecs.at[:, _R_LN1G, :dim].set(stack("ln1_g"))
    vecs = vecs.at[:, _R_LN1B, :dim].set(stack("ln1_b"))
    vecs = vecs.at[:, _R_BO, :dim].set(stack("bo"))
    vecs = vecs.at[:, _R_LN2G, :dim].set(stack("ln2_g"))
    vecs = vecs.at[:, _R_LN2B, :dim].set(stack("ln2_b"))
    vecs = vecs.at[:, _R_B2, :dim].set(stack("b2"))
    vecs = vecs.at[:, _R_B1, :mlp_dim].set(stack("b1"))

    return {
        "embed_w": params["embed_w"].astype(jnp.bfloat16),
        "embed_b": params["embed_b"],
        "pos": params["pos"],
        "wqkv": wqkv.astype(jnp.bfloat16),
        "wo": stack("wo").astype(jnp.bfloat16),
        "w1": stack("w1").astype(jnp.bfloat16),
        "w2": stack("w2").astype(jnp.bfloat16),
        "vecs": vecs,
        "fm_w": params["fm_w"].astype(jnp.bfloat16),
        "fm_b": params["fm_b"],
        "fm_ln_g": params["fm_ln_g"],
        "fm_ln_b": params["fm_ln_b"],
        "conv_w_big": jnp.kron(jnp.eye(groups, dtype=jnp.float32),
                               params["conv_w"].T).astype(jnp.bfloat16),
        "conv_b_big": jnp.tile(params["conv_b"], (groups,)).reshape(1, fm_dim),
    }


# --------------------------------- forward ------------------------------------
def vit_forward(x_nchw, packed, *, image_size, patch_num, heads, dim_head,
                channels, batch_blocks=1):
    B, C, H, W = x_nchw.shape
    p = image_size // patch_num
    nH = nW = patch_num
    n_tokens = nH * nW
    patch_dim = C * p * p
    dim = packed["embed_w"].shape[1]
    depth = packed["wqkv"].shape[0]
    mlp_dim = packed["w1"].shape[2]
    fm_dim = packed["fm_w"].shape[1]
    vp = packed["vecs"].shape[2]
    inner = heads * dim_head

    assert B % batch_blocks == 0
    tb = B // batch_blocks          # batch elements folded into each grid block
    m = tb * n_tokens               # flattened token rows per block

    # glue: einops 'b c (h p1) (w p2) -> b (h w) (p1 p2 c)', flattened over batch
    xp = x_nchw.reshape(B, C, nH, p, nW, p)
    xp = jnp.transpose(xp, (0, 2, 4, 3, 5, 1))
    xp = xp.reshape(B * n_tokens, patch_dim).astype(jnp.bfloat16)

    # positional embedding tiled over the folded batch (constant per block)
    pos = jnp.tile(packed["pos"], (tb, 1))

    # block-diagonal additive mask: tokens of different batch elements inside one
    # folded block must not attend to each other.
    tok = jnp.arange(m) // n_tokens
    attn_bias = jnp.where(tok[:, None] == tok[None, :], 0.0, -1e30).astype(jnp.float32)

    kern = functools.partial(vit_fused_kernel, heads=heads, dim_head=dim_head)

    def const(shape):
        n = len(shape)
        return pl.BlockSpec(shape, lambda b, l, n=n: (0,) * n)     # fetched once

    def per_layer(tail):
        n = len(tail)
        return pl.BlockSpec((1,) + tail, lambda b, l, n=n: (l,) + (0,) * n)

    in_specs = [
        pl.BlockSpec((m, patch_dim), lambda b, l: (b, 0)),         # patches (folded batch)
        const((patch_dim, dim)),                                   # embed_w
        const((1, dim)),                                           # embed_b
        const((m, dim)),                                           # pos (tiled)
        const((m, m)),                                             # attention batch mask
        per_layer((dim, 3 * inner)),                               # fused qkv weight
        per_layer((inner, dim)),                                   # wo
        per_layer((dim, mlp_dim)),                                 # w1
        per_layer((mlp_dim, dim)),                                 # w2
        per_layer((_VEC_ROWS, vp)),                                # coalesced small vectors
        const((dim, fm_dim)),                                      # fm_w
        const((1, fm_dim)),                                        # fm_b
        const((1, fm_dim)),                                        # fm_ln_g
        const((1, fm_dim)),                                        # fm_ln_b
        const((fm_dim, fm_dim)),                                   # conv (blockdiag)
        const((1, fm_dim)),                                        # conv bias
    ]

    y = pl.pallas_call(
        kern,
        grid=(batch_blocks, depth),
        in_specs=in_specs,
        out_specs=pl.BlockSpec((m, fm_dim), lambda b, l: (b, 0)),
        out_shape=jax.ShapeDtypeStruct((B * n_tokens, fm_dim), jnp.float32),
        scratch_shapes=[pltpu.VMEM((m, dim), jnp.float32)],        # resident activation
        compiler_params=pltpu.CompilerParams(
            dimension_semantics=("parallel", "arbitrary"),
            vmem_limit_bytes=32 * 1024 * 1024),
    )(xp, packed["embed_w"], packed["embed_b"], pos, attn_bias,
      packed["wqkv"], packed["wo"], packed["w1"], packed["w2"], packed["vecs"],
      packed["fm_w"], packed["fm_b"], packed["fm_ln_g"], packed["fm_ln_b"],
      packed["conv_w_big"], packed["conv_b_big"])

    # glue: x.view(B, H, W, -1).permute(0, 3, 1, 2) -> NCHW output
    out = y.reshape(B, image_size, image_size, channels)
    return jnp.transpose(out, (0, 3, 1, 2))


# ----------------------------------- main --------------------------------------
if __name__ == "__main__":
    image_size = 16
    patch_num = 4          # patch_size = 16 // 4 = 4
    dim = 32
    depth = 2
    heads = 4
    dim_head = 8           # inner_dim = 32
    mlp_dim = 64
    channels = 4
    B = 2

    key = jax.random.PRNGKey(0)
    pkey, xkey = jax.random.split(key)
    params = init_params(pkey, image_size=image_size, patch_num=patch_num, dim=dim,
                         depth=depth, heads=heads, dim_head=dim_head,
                         mlp_dim=mlp_dim, channels=channels)
    packed = pack_params(params, heads=heads, dim_head=dim_head, channels=channels)
    x = jax.random.normal(xkey, (B, channels, image_size, image_size),
                          dtype=jnp.float32)

    # batch_blocks=1 folds the whole batch into one block (best on v5e/v6e);
    # set batch_blocks=2 on v7x to keep a 2-way "parallel" axis for its 2 TCs.
    fwd = jax.jit(functools.partial(vit_forward, image_size=image_size,
                                    patch_num=patch_num, heads=heads,
                                    dim_head=dim_head, channels=channels,
                                    batch_blocks=1))
    out = jax.block_until_ready(fwd(x, packed))
    assert out.shape == (B, channels, image_size, image_size), out.shape
    assert bool(jnp.all(jnp.isfinite(out)))
    print("KERNEL_OK")
</pallas_src>

<mosaic_0001>
module attributes {stable_mosaic.version = 11 : i64} {
  func.func @vit_fused_kernel(%arg0: i32, %arg1: i32, %arg2: memref<32x64xbf16, #tpu.memory_space<vmem>>, %arg3: memref<64x32xbf16, #tpu.memory_space<vmem>>, %arg4: memref<1x32xf32, #tpu.memory_space<vmem>>, %arg5: memref<32x32xf32, #tpu.memory_space<vmem>>, %arg6: memref<32x32xf32, #tpu.memory_space<vmem>>, %arg7: memref<1x32x96xbf16, #tpu.memory_space<vmem>>, %arg8: memref<1x32x32xbf16, #tpu.memory_space<vmem>>, %arg9: memref<1x32x64xbf16, #tpu.memory_space<vmem>>, %arg10: memref<1x64x32xbf16, #tpu.memory_space<vmem>>, %arg11: memref<1x8x128xf32, #tpu.memory_space<vmem>>, %arg12: memref<32x64xbf16, #tpu.memory_space<vmem>>, %arg13: memref<1x64xf32, #tpu.memory_space<vmem>>, %arg14: memref<1x64xf32, #tpu.memory_space<vmem>>, %arg15: memref<1x64xf32, #tpu.memory_space<vmem>>, %arg16: memref<64x64xbf16, #tpu.memory_space<vmem>>, %arg17: memref<1x64xf32, #tpu.memory_space<vmem>>, %arg18: memref<32x64xf32, #tpu.memory_space<vmem>>, %arg19: memref<32x32xf32, #tpu.memory_space<vmem>>) attributes {dimension_semantics = [#tpu.dimension_semantics<parallel>, #tpu.dimension_semantics<arbitrary>], iteration_bounds = array<i64: 1, 2>, scalar_prefetch = 0 : i64, scratch_operands = 1 : i64, tpu.core_type = #tpu.core_type<tc>, window_params = [{transform_indices = @transform_0, window_bounds = array<i64: 32, 64>}, {pipeline_mode = #tpu.pipeline_mode<synchronous>, transform_indices = @transform_1, window_bounds = array<i64: 64, 32>}, {pipeline_mode = #tpu.pipeline_mode<synchronous>, transform_indices = @transform_2, window_bounds = array<i64: 1, 32>}, {pipeline_mode = #tpu.pipeline_mode<synchronous>, transform_indices = @transform_3, window_bounds = array<i64: 32, 32>}, {pipeline_mode = #tpu.pipeline_mode<synchronous>, transform_indices = @transform_4, window_bounds = array<i64: 32, 32>}, {transform_indices = @transform_5, window_bounds = array<i64: 1, 32, 96>}, {transform_indices = @transform_6, window_bounds = array<i64: 1, 32, 32>}, {transform_indices = @transform_7, window_bounds = array<i64: 1, 32, 64>}, {transform_indices = @transform_8, window_bounds = array<i64: 1, 64, 32>}, {transform_indices = @transform_9, window_bounds = array<i64: 1, 8, 128>}, {pipeline_mode = #tpu.pipeline_mode<synchronous>, transform_indices = @transform_10, window_bounds = array<i64: 32, 64>}, {pipeline_mode = #tpu.pipeline_mode<synchronous>, transform_indices = @transform_11, window_bounds = array<i64: 1, 64>}, {pipeline_mode = #tpu.pipeline_mode<synchronous>, transform_indices = @transform_12, window_bounds = array<i64: 1, 64>}, {pipeline_mode = #tpu.pipeline_mode<synchronous>, transform_indices = @transform_13, window_bounds = array<i64: 1, 64>}, {pipeline_mode = #tpu.pipeline_mode<synchronous>, transform_indices = @transform_14, window_bounds = array<i64: 64, 64>}, {pipeline_mode = #tpu.pipeline_mode<synchronous>, transform_indices = @transform_15, window_bounds = array<i64: 1, 64>}, {transform_indices = @transform_16, window_bounds = array<i64: 32, 64>}]} {
    %c0_i32 = arith.constant 0 : i32
    %0 = arith.cmpi eq, %arg1, %c0_i32 : i32
    %1 = arith.extui %0 : i1 to i32
    %c0_i32_0 = arith.constant 0 : i32
    %2 = arith.cmpi ne, %1, %c0_i32_0 : i32
    scf.if %2 {
      %c0_55 = arith.constant 0 : index
      %c0_56 = arith.constant 0 : index
      %176 = vector.load %arg2[%c0_55, %c0_56] : memref<32x64xbf16, #tpu.memory_space<vmem>>, vector<32x64xbf16>
      %c0_57 = arith.constant 0 : index
      %c0_58 = arith.constant 0 : index
      %177 = vector.load %arg3[%c0_57, %c0_58] : memref<64x32xbf16, #tpu.memory_space<vmem>>, vector<64x32xbf16>
      %cst_59 = arith.constant dense<0.000000e+00> : vector<32x32xf32>
      %178 = tpu.matmul %176, %177, %cst_59 {dimension_numbers = #tpu.dot_dimension_numbers<[1], [0], [0], [1], [0, 0, 1, 1], [], []>} : vector<32x64xbf16>, vector<64x32xbf16>, vector<32x32xf32> -> vector<32x32xf32>
      %c0_60 = arith.constant 0 : index
      %c0_61 = arith.constant 0 : index
      %179 = vector.load %arg4[%c0_60, %c0_61] : memref<1x32xf32, #tpu.memory_space<vmem>>, vector<1x32xf32>
      %180 = vector.broadcast %179 : vector<1x32xf32> to vector<32x32xf32>
      %181 = arith.addf %178, %180 : vector<32x32xf32>
      %c0_62 = arith.constant 0 : index
      %c0_63 = arith.constant 0 : index
      %182 = vector.load %arg5[%c0_62, %c0_63] : memref<32x32xf32, #tpu.memory_space<vmem>>, vector<32x32xf32>
      %183 = arith.addf %181, %182 : vector<32x32xf32>
      %c0_64 = arith.constant 0 : index
      %c0_65 = arith.constant 0 : index
      %184 = vector.load %arg19[%c0_64, %c0_65] : memref<32x32xf32, #tpu.memory_space<vmem>>, vector<32x32xf32>
      tpu.vector_store %arg19[%c0_64, %c0_65], %183 {strides = array<i32>} : memref<32x32xf32, #tpu.memory_space<vmem>>, vector<32x32xf32>,
    } else {
    }
    %c0 = arith.constant 0 : index
    %c0_1 = arith.constant 0 : index
    %3 = vector.load %arg19[%c0, %c0_1] : memref<32x32xf32, #tpu.memory_space<vmem>>, vector<32x32xf32>
    %c0_2 = arith.constant 0 : index
    %c0_3 = arith.constant 0 : index
    %c0_4 = arith.constant 0 : index
    %4 = vector.load %arg11[%c0_2, %c0_3, %c0_4] : memref<1x8x128xf32, #tpu.memory_space<vmem>>, vector<1x8x128xf32>
    %5 = vector.shape_cast %4 : vector<1x8x128xf32> to vector<8x128xf32>
    %6 = vector.extract_strided_slice %5 {offsets = [0, 0], sizes = [1, 32], strides = [1, 1]} : vector<8x128xf32> to vector<1x32xf32>
    %7 = vector.extract_strided_slice %5 {offsets = [1, 0], sizes = [1, 32], strides = [1, 1]} : vector<8x128xf32> to vector<1x32xf32>
    %cst = arith.constant dense<0.000000e+00> : vector<32xf32>
    %8 = vector.multi_reduction <add>, %3, %cst [1] : vector<32x32xf32> to vector<32xf32>
    %9 = vector.shape_cast %8 : vector<32xf32> to vector<32x1xf32>
    %cst_5 = arith.constant 3.200000e+01 : f32
    %10 = vector.broadcast %cst_5 : f32 to vector<32x1xf32>
    %11 = arith.divf %9, %10 : vector<32x1xf32>
    %12 = vector.broadcast %11 : vector<32x1xf32> to vector<32x32xf32>
    %13 = arith.subf %3, %12 : vector<32x32xf32>
    %14 = arith.mulf %13, %13 : vector<32x32xf32>
    %cst_6 = arith.constant dense<0.000000e+00> : vector<32xf32>
    %15 = vector.multi_reduction <add>, %14, %cst_6 [1] : vector<32x32xf32> to vector<32xf32>
    %16 = vector.shape_cast %15 : vector<32xf32> to vector<32x1xf32>
    %cst_7 = arith.constant 3.200000e+01 : f32
    %17 = vector.broadcast %cst_7 : f32 to vector<32x1xf32>
    %18 = arith.divf %16, %17 : vector<32x1xf32>
    %cst_8 = arith.constant 9.99999974E-6 : f32
    %19 = vector.broadcast %cst_8 : f32 to vector<32x1xf32>
    %20 = arith.addf %18, %19 : vector<32x1xf32>
    %21 = math.rsqrt %20 : vector<32x1xf32>
    %22 = vector.broadcast %21 : vector<32x1xf32> to vector<32x32xf32>
    %23 = arith.mulf %13, %22 : vector<32x32xf32>
    %24 = vector.broadcast %6 : vector<1x32xf32> to vector<32x32xf32>
    %25 = arith.mulf %23, %24 : vector<32x32xf32>
    %26 = vector.broadcast %7 : vector<1x32xf32> to vector<32x32xf32>
    %27 = arith.addf %25, %26 : vector<32x32xf32>
    %28 = arith.truncf %27 : vector<32x32xf32> to vector<32x32xbf16>
    %c0_9 = arith.constant 0 : index
    %c0_10 = arith.constant 0 : index
    %c0_11 = arith.constant 0 : index
    %29 = vector.load %arg7[%c0_9, %c0_10, %c0_11] : memref<1x32x96xbf16, #tpu.memory_space<vmem>>, vector<1x32x96xbf16>
    %30 = vector.shape_cast %29 : vector<1x32x96xbf16> to vector<32x96xbf16>
    %cst_12 = arith.constant dense<0.000000e+00> : vector<32x96xf32>
    %31 = tpu.matmul %28, %30, %cst_12 {dimension_numbers = #tpu.dot_dimension_numbers<[1], [0], [0], [1], [0, 0, 1, 1], [], []>} : vector<32x32xbf16>, vector<32x96xbf16>, vector<32x96xf32> -> vector<32x96xf32>
    %32 = arith.truncf %31 : vector<32x96xf32> to vector<32x96xbf16>
    %33 = vector.extract_strided_slice %32 {offsets = [0, 0], sizes = [32, 8], strides = [1, 1]} : vector<32x96xbf16> to vector<32x8xbf16>
    %34 = vector.extract_strided_slice %32 {offsets = [0, 8], sizes = [32, 8], strides = [1, 1]} : vector<32x96xbf16> to vector<32x8xbf16>
    %35 = vector.extract_strided_slice %32 {offsets = [0, 16], sizes = [32, 8], strides = [1, 1]} : vector<32x96xbf16> to vector<32x8xbf16>
    %36 = vector.extract_strided_slice %32 {offsets = [0, 24], sizes = [32, 8], strides = [1, 1]} : vector<32x96xbf16> to vector<32x8xbf16>
    %37 = vector.shape_cast %33 : vector<32x8xbf16> to vector<1x32x8xbf16>
    %38 = vector.shape_cast %34 : vector<32x8xbf16> to vector<1x32x8xbf16>
    %39 = vector.shape_cast %35 : vector<32x8xbf16> to vector<1x32x8xbf16>
    %40 = vector.shape_cast %36 : vector<32x8xbf16> to vector<1x32x8xbf16>
    %41 = tpu.concatenate %37, %38, %39, %40 in 0 : vector<1x32x8xbf16>, vector<1x32x8xbf16>, vector<1x32x8xbf16>, vector<1x32x8xbf16> -> vector<4x32x8xbf16>
    %42 = vector.extract_strided_slice %32 {offsets = [0, 32], sizes = [32, 8], strides = [1, 1]} : vector<32x96xbf16> to vector<32x8xbf16>
    %43 = vector.extract_strided_slice %32 {offsets = [0, 40], sizes = [32, 8], strides = [1, 1]} : vector<32x96xbf16> to vector<32x8xbf16>
    %44 = vector.extract_strided_slice %32 {offsets = [0, 48], sizes = [32, 8], strides = [1, 1]} : vector<32x96xbf16> to vector<32x8xbf16>
    %45 = vector.extract_strided_slice %32 {offsets = [0, 56], sizes = [32, 8], strides = [1, 1]} : vector<32x96xbf16> to vector<32x8xbf16>
    %46 = vector.shape_cast %42 : vector<32x8xbf16> to vector<1x32x8xbf16>
    %47 = vector.shape_cast %43 : vector<32x8xbf16> to vector<1x32x8xbf16>
    %48 = vector.shape_cast %44 : vector<32x8xbf16> to vector<1x32x8xbf16>
    %49 = vector.shape_cast %45 : vector<32x8xbf16> to vector<1x32x8xbf16>
    %50 = tpu.concatenate %46, %47, %48, %49 in 0 : vector<1x32x8xbf16>, vector<1x32x8xbf16>, vector<1x32x8xbf16>, vector<1x32x8xbf16> -> vector<4x32x8xbf16>
    %51 = vector.extract_strided_slice %32 {offsets = [0, 64], sizes = [32, 8], strides = [1, 1]} : vector<32x96xbf16> to vector<32x8xbf16>
    %52 = vector.extract_strided_slice %32 {offsets = [0, 72], sizes = [32, 8], strides = [1, 1]} : vector<32x96xbf16> to vector<32x8xbf16>
    %53 = vector.extract_strided_slice %32 {offsets = [0, 80], sizes = [32, 8], strides = [1, 1]} : vector<32x96xbf16> to vector<32x8xbf16>
    %54 = vector.extract_strided_slice %32 {offsets = [0, 88], sizes = [32, 8], strides = [1, 1]} : vector<32x96xbf16> to vector<32x8xbf16>
    %55 = vector.shape_cast %51 : vector<32x8xbf16> to vector<1x32x8xbf16>
    %56 = vector.shape_cast %52 : vector<32x8xbf16> to vector<1x32x8xbf16>
    %57 = vector.shape_cast %53 : vector<32x8xbf16> to vector<1x32x8xbf16>
    %58 = vector.shape_cast %54 : vector<32x8xbf16> to vector<1x32x8xbf16>
    %59 = tpu.concatenate %55, %56, %57, %58 in 0 : vector<1x32x8xbf16>, vector<1x32x8xbf16>, vector<1x32x8xbf16>, vector<1x32x8xbf16> -> vector<4x32x8xbf16>
    %cst_13 = arith.constant dense<0.000000e+00> : vector<4x32x32xf32>
    %60 = tpu.matmul %41, %50, %cst_13 {dimension_numbers = #tpu.dot_dimension_numbers<[2], [2], [1], [1], [0, 0, 0, 1, 1, 1], [0], [0]>} : vector<4x32x8xbf16>, vector<4x32x8xbf16>, vector<4x32x32xf32> -> vector<4x32x32xf32>
    %c0_14 = arith.constant 0 : index
    %c0_15 = arith.constant 0 : index
    %61 = vector.load %arg6[%c0_14, %c0_15] : memref<32x32xf32, #tpu.memory_space<vmem>>, vector<32x32xf32>
    %62 = vector.shape_cast %61 : vector<32x32xf32> to vector<1x32x32xf32>
    %63 = vector.broadcast %62 : vector<1x32x32xf32> to vector<4x32x32xf32>
    %64 = arith.addf %60, %63 : vector<4x32x32xf32>
    %cst_16 = arith.constant dense<0xFF800000> : vector<4x32xf32>
    %65 = vector.multi_reduction <maximumf>, %64, %cst_16 [2] : vector<4x32x32xf32> to vector<4x32xf32>
    %66 = vector.shape_cast %65 : vector<4x32xf32> to vector<4x32x1xf32>
    %67 = vector.broadcast %66 : vector<4x32x1xf32> to vector<4x32x32xf32>
    %68 = arith.subf %64, %67 : vector<4x32x32xf32>
    %69 = math.exp %68 : vector<4x32x32xf32>
    %cst_17 = arith.constant dense<0.000000e+00> : vector<4x32xf32>
    %70 = vector.multi_reduction <add>, %69, %cst_17 [2] : vector<4x32x32xf32> to vector<4x32xf32>
    %71 = vector.shape_cast %70 : vector<4x32xf32> to vector<4x32x1xf32>
    %72 = tpu.reciprocal %71 {approx = true} : vector<4x32x1xf32> -> vector<4x32x1xf32>
    %73 = vector.broadcast %72 : vector<4x32x1xf32> to vector<4x32x32xf32>
    %74 = arith.mulf %69, %73 : vector<4x32x32xf32>
    %75 = arith.truncf %74 : vector<4x32x32xf32> to vector<4x32x32xbf16>
    %cst_18 = arith.constant dense<0.000000e+00> : vector<4x32x8xf32>
    %76 = tpu.matmul %75, %59, %cst_18 {dimension_numbers = #tpu.dot_dimension_numbers<[2], [1], [1], [2], [0, 0, 0, 1, 1, 2], [0], [0]>} : vector<4x32x32xbf16>, vector<4x32x8xbf16>, vector<4x32x8xf32> -> vector<4x32x8xf32>
    %77 = vector.extract_strided_slice %76 {offsets = [0, 0, 0], sizes = [1, 32, 8], strides = [1, 1, 1]} : vector<4x32x8xf32> to vector<1x32x8xf32>
    %78 = vector.shape_cast %77 : vector<1x32x8xf32> to vector<32x8xf32>
    %79 = vector.extract_strided_slice %76 {offsets = [1, 0, 0], sizes = [1, 32, 8], strides = [1, 1, 1]} : vector<4x32x8xf32> to vector<1x32x8xf32>
    %80 = vector.shape_cast %79 : vector<1x32x8xf32> to vector<32x8xf32>
    %81 = vector.extract_strided_slice %76 {offsets = [2, 0, 0], sizes = [1, 32, 8], strides = [1, 1, 1]} : vector<4x32x8xf32> to vector<1x32x8xf32>
    %82 = vector.shape_cast %81 : vector<1x32x8xf32> to vector<32x8xf32>
    %83 = vector.extract_strided_slice %76 {offsets = [3, 0, 0], sizes = [1, 32, 8], strides = [1, 1, 1]} : vector<4x32x8xf32> to vector<1x32x8xf32>
    %84 = vector.shape_cast %83 : vector<1x32x8xf32> to vector<32x8xf32>
    %85 = tpu.concatenate %78, %80, %82, %84 in 1 : vector<32x8xf32>, vector<32x8xf32>, vector<32x8xf32>, vector<32x8xf32> -> vector<32x32xf32>
    %86 = arith.truncf %85 : vector<32x32xf32> to vector<32x32xbf16>
    %c0_19 = arith.constant 0 : index
    %c0_20 = arith.constant 0 : index
    %c0_21 = arith.constant 0 : index
    %87 = vector.load %arg8[%c0_19, %c0_20, %c0_21] : memref<1x32x32xbf16, #tpu.memory_space<vmem>>, vector<1x32x32xbf16>
    %88 = vector.shape_cast %87 : vector<1x32x32xbf16> to vector<32x32xbf16>
    %cst_22 = arith.constant dense<0.000000e+00> : vector<32x32xf32>
    %89 = tpu.matmul %86, %88, %cst_22 {dimension_numbers = #tpu.dot_dimension_numbers<[1], [0], [0], [1], [0, 0, 1, 1], [], []>} : vector<32x32xbf16>, vector<32x32xbf16>, vector<32x32xf32> -> vector<32x32xf32>
    %90 = arith.addf %3, %89 : vector<32x32xf32>
    %91 = vector.extract_strided_slice %5 {offsets = [2, 0], sizes = [1, 32], strides = [1, 1]} : vector<8x128xf32> to vector<1x32xf32>
    %92 = vector.broadcast %91 : vector<1x32xf32> to vector<32x32xf32>
    %93 = arith.addf %90, %92 : vector<32x32xf32>
    %94 = vector.extract_strided_slice %5 {offsets = [3, 0], sizes = [1, 32], strides = [1, 1]} : vector<8x128xf32> to vector<1x32xf32>
    %95 = vector.extract_strided_slice %5 {offsets = [4, 0], sizes = [1, 32], strides = [1, 1]} : vector<8x128xf32> to vector<1x32xf32>
    %cst_23 = arith.constant dense<0.000000e+00> : vector<32xf32>
    %96 = vector.multi_reduction <add>, %93, %cst_23 [1] : vector<32x32xf32> to vector<32xf32>
    %97 = vector.shape_cast %96 : vector<32xf32> to vector<32x1xf32>
    %cst_24 = arith.constant 3.200000e+01 : f32
    %98 = vector.broadcast %cst_24 : f32 to vector<32x1xf32>
    %99 = arith.divf %97, %98 : vector<32x1xf32>
    %100 = vector.broadcast %99 : vector<32x1xf32> to vector<32x32xf32>
    %101 = arith.subf %93, %100 : vector<32x32xf32>
    %102 = arith.mulf %101, %101 : vector<32x32xf32>
    %cst_25 = arith.constant dense<0.000000e+00> : vector<32xf32>
    %103 = vector.multi_reduction <add>, %102, %cst_25 [1] : vector<32x32xf32> to vector<32xf32>
    %104 = vector.shape_cast %103 : vector<32xf32> to vector<32x1xf32>
    %cst_26 = arith.constant 3.200000e+01 : f32
    %105 = vector.broadcast %cst_26 : f32 to vector<32x1xf32>
    %106 = arith.divf %104, %105 : vector<32x1xf32>
    %cst_27 = arith.constant 9.99999974E-6 : f32
    %107 = vector.broadcast %cst_27 : f32 to vector<32x1xf32>
    %108 = arith.addf %106, %107 : vector<32x1xf32>
    %109 = math.rsqrt %108 : vector<32x1xf32>
    %110 = vector.broadcast %109 : vector<32x1xf32> to vector<32x32xf32>
    %111 = arith.mulf %101, %110 : vector<32x32xf32>
    %112 = vector.broadcast %94 : vector<1x32xf32> to vector<32x32xf32>
    %113 = arith.mulf %111, %112 : vector<32x32xf32>
    %114 = vector.broadcast %95 : vector<1x32xf32> to vector<32x32xf32>
    %115 = arith.addf %113, %114 : vector<32x32xf32>
    %116 = arith.truncf %115 : vector<32x32xf32> to vector<32x32xbf16>
    %c0_28 = arith.constant 0 : index
    %c0_29 = arith.constant 0 : index
    %c0_30 = arith.constant 0 : index
    %117 = vector.load %arg9[%c0_28, %c0_29, %c0_30] : memref<1x32x64xbf16, #tpu.memory_space<vmem>>, vector<1x32x64xbf16>
    %118 = vector.shape_cast %117 : vector<1x32x64xbf16> to vector<32x64xbf16>
    %cst_31 = arith.constant dense<0.000000e+00> : vector<32x64xf32>
    %119 = tpu.matmul %116, %118, %cst_31 {dimension_numbers = #tpu.dot_dimension_numbers<[1], [0], [0], [1], [0, 0, 1, 1], [], []>} : vector<32x32xbf16>, vector<32x64xbf16>, vector<32x64xf32> -> vector<32x64xf32>
    %120 = vector.extract_strided_slice %5 {offsets = [6, 0], sizes = [1, 64], strides = [1, 1]} : vector<8x128xf32> to vector<1x64xf32>
    %121 = vector.broadcast %120 : vector<1x64xf32> to vector<32x64xf32>
    %122 = arith.addf %119, %121 : vector<32x64xf32>
    %cst_32 = arith.constant 5.000000e-01 : f32
    %123 = vector.broadcast %cst_32 : f32 to vector<32x64xf32>
    %124 = arith.mulf %123, %122 : vector<32x64xf32>
    %cst_33 = arith.constant 0.707106769 : f32
    %125 = vector.broadcast %cst_33 : f32 to vector<32x64xf32>
    %126 = arith.mulf %122, %125 : vector<32x64xf32>
    %cst_34 = arith.constant 0.000000e+00 : f32
    %127 = vector.broadcast %cst_34 : f32 to vector<32x64xf32>
    %128 = arith.cmpf oge, %126, %127 : vector<32x64xf32>
    %cst_35 = arith.constant 1.000000e+00 : f32
    %cst_36 = arith.constant -1.000000e+00 : f32
    %129 = vector.broadcast %cst_35 : f32 to vector<32x64xf32>
    %130 = vector.broadcast %cst_36 : f32 to vector<32x64xf32>
    %131 = arith.select %128, %129, %130 : vector<32x64xi1>, vector<32x64xf32>
    %132 = math.absf %126 : vector<32x64xf32>
    %cst_37 = arith.constant 0.327591091 : f32
    %133 = vector.broadcast %cst_37 : f32 to vector<32x64xf32>
    %134 = arith.mulf %133, %132 : vector<32x64xf32>
    %cst_38 = arith.constant 1.000000e+00 : f32
    %135 = vector.broadcast %cst_38 : f32 to vector<32x64xf32>
    %136 = arith.addf %135, %134 : vector<32x64xf32>
    %cst_39 = arith.constant 1.000000e+00 : f32
    %137 = vector.broadcast %cst_39 : f32 to vector<32x64xf32>
    %138 = arith.divf %137, %136 : vector<32x64xf32>
    %cst_40 = arith.constant 1.06140542 : f32
    %139 = vector.broadcast %cst_40 : f32 to vector<32x64xf32>
    %140 = arith.mulf %139, %138 : vector<32x64xf32>
    %cst_41 = arith.constant -1.45315206 : f32
    %141 = vector.broadcast %cst_41 : f32 to vector<32x64xf32>
    %142 = arith.addf %140, %141 : vector<32x64xf32>
    %143 = arith.mulf %142, %138 : vector<32x64xf32>
    %cst_42 = arith.constant 1.42141378 : f32
    %144 = vector.broadcast %cst_42 : f32 to vector<32x64xf32>
    %145 = arith.addf %143, %144 : vector<32x64xf32>
    %146 = arith.mulf %145, %138 : vector<32x64xf32>
    %cst_43 = arith.constant -0.284496725 : f32
    %147 = vector.broadcast %cst_43 : f32 to vector<32x64xf32>
    %148 = arith.addf %146, %147 : vector<32x64xf32>
    %149 = arith.mulf %148, %138 : vector<32x64xf32>
    %cst_44 = arith.constant 0.254829586 : f32
    %150 = vector.broadcast %cst_44 : f32 to vector<32x64xf32>
    %151 = arith.addf %149, %150 : vector<32x64xf32>
    %152 = arith.mulf %151, %138 : vector<32x64xf32>
    %cst_45 = arith.constant 0.000000e+00 : f32
    %153 = vector.broadcast %cst_45 : f32 to vector<32x64xf32>
    %154 = arith.subf %153, %132 : vector<32x64xf32>
    %155 = arith.mulf %154, %132 : vector<32x64xf32>
    %156 = math.exp %155 : vector<32x64xf32>
    %157 = arith.mulf %152, %156 : vector<32x64xf32>
    %cst_46 = arith.constant 1.000000e+00 : f32
    %158 = vector.broadcast %cst_46 : f32 to vector<32x64xf32>
    %159 = arith.subf %158, %157 : vector<32x64xf32>
    %160 = arith.mulf %131, %159 : vector<32x64xf32>
    %cst_47 = arith.constant 1.000000e+00 : f32
    %161 = vector.broadcast %cst_47 : f32 to vector<32x64xf32>
    %162 = arith.addf %161, %160 : vector<32x64xf32>
    %163 = arith.mulf %124, %162 : vector<32x64xf32>
    %164 = arith.truncf %163 : vector<32x64xf32> to vector<32x64xbf16>
    %c0_48 = arith.constant 0 : index
    %c0_49 = arith.constant 0 : index
    %c0_50 = arith.constant 0 : index
    %165 = vector.load %arg10[%c0_48, %c0_49, %c0_50] : memref<1x64x32xbf16, #tpu.memory_space<vmem>>, vector<1x64x32xbf16>
    %166 = vector.shape_cast %165 : vector<1x64x32xbf16> to vector<64x32xbf16>
    %cst_51 = arith.constant dense<0.000000e+00> : vector<32x32xf32>
    %167 = tpu.matmul %164, %166, %cst_51 {dimension_numbers = #tpu.dot_dimension_numbers<[1], [0], [0], [1], [0, 0, 1, 1], [], []>} : vector<32x64xbf16>, vector<64x32xbf16>, vector<32x32xf32> -> vector<32x32xf32>
    %168 = arith.addf %93, %167 : vector<32x32xf32>
    %169 = vector.extract_strided_slice %5 {offsets = [5, 0], sizes = [1, 32], strides = [1, 1]} : vector<8x128xf32> to vector<1x32xf32>
    %170 = vector.broadcast %169 : vector<1x32xf32> to vector<32x32xf32>
    %171 = arith.addf %168, %170 : vector<32x32xf32>
    %c0_52 = arith.constant 0 : index
    %c0_53 = arith.constant 0 : index
    %172 = vector.load %arg19[%c0_52, %c0_53] : memref<32x32xf32, #tpu.memory_space<vmem>>, vector<32x32xf32>
    tpu.vector_store %arg19[%c0_52, %c0_53], %171 {strides = array<i32>} : memref<32x32xf32, #tpu.memory_space<vmem>>, vector<32x32xf32>,
    %c1_i32 = arith.constant 1 : i32
    %173 = arith.cmpi eq, %arg1, %c1_i32 : i32
    %174 = arith.extui %173 : i1 to i32
    %c0_i32_54 = arith.constant 0 : i32
    %175 = arith.cmpi ne, %174, %c0_i32_54 : i32
    scf.if %175 {
      %176 = arith.truncf %171 : vector<32x32xf32> to vector<32x32xbf16>
      %c0_55 = arith.constant 0 : index
      %c0_56 = arith.constant 0 : index
      %177 = vector.load %arg12[%c0_55, %c0_56] : memref<32x64xbf16, #tpu.memory_space<vmem>>, vector<32x64xbf16>
      %cst_57 = arith.constant dense<0.000000e+00> : vector<32x64xf32>
      %178 = tpu.matmul %176, %177, %cst_57 {dimension_numbers = #tpu.dot_dimension_numbers<[1], [0], [0], [1], [0, 0, 1, 1], [], []>} : vector<32x32xbf16>, vector<32x64xbf16>, vector<32x64xf32> -> vector<32x64xf32>
      %c0_58 = arith.constant 0 : index
      %c0_59 = arith.constant 0 : index
      %179 = vector.load %arg13[%c0_58, %c0_59] : memref<1x64xf32, #tpu.memory_space<vmem>>, vector<1x64xf32>
      %180 = vector.broadcast %179 : vector<1x64xf32> to vector<32x64xf32>
      %181 = arith.addf %178, %180 : vector<32x64xf32>
      %c0_60 = arith.constant 0 : index
      %c0_61 = arith.constant 0 : index
      %182 = vector.load %arg14[%c0_60, %c0_61] : memref<1x64xf32, #tpu.memory_space<vmem>>, vector<1x64xf32>
      %c0_62 = arith.constant 0 : index
      %c0_63 = arith.constant 0 : index
      %183 = vector.load %arg15[%c0_62, %c0_63] : memref<1x64xf32, #tpu.memory_space<vmem>>, vector<1x64xf32>
      %cst_64 = arith.constant dense<0.000000e+00> : vector<32xf32>
      %184 = vector.multi_reduction <add>, %181, %cst_64 [1] : vector<32x64xf32> to vector<32xf32>
      %185 = vector.shape_cast %184 : vector<32xf32> to vector<32x1xf32>
      %cst_65 = arith.constant 6.400000e+01 : f32
      %186 = vector.broadcast %cst_65 : f32 to vector<32x1xf32>
      %187 = arith.divf %185, %186 : vector<32x1xf32>
      %188 = vector.broadcast %187 : vector<32x1xf32> to vector<32x64xf32>
      %189 = arith.subf %181, %188 : vector<32x64xf32>
      %190 = arith.mulf %189, %189 : vector<32x64xf32>
      %cst_66 = arith.constant dense<0.000000e+00> : vector<32xf32>
      %191 = vector.multi_reduction <add>, %190, %cst_66 [1] : vector<32x64xf32> to vector<32xf32>
      %192 = vector.shape_cast %191 : vector<32xf32> to vector<32x1xf32>
      %cst_67 = arith.constant 6.400000e+01 : f32
      %193 = vector.broadcast %cst_67 : f32 to vector<32x1xf32>
      %194 = arith.divf %192, %193 : vector<32x1xf32>
      %cst_68 = arith.constant 9.99999974E-6 : f32
      %195 = vector.broadcast %cst_68 : f32 to vector<32x1xf32>
      %196 = arith.addf %194, %195 : vector<32x1xf32>
      %197 = math.rsqrt %196 : vector<32x1xf32>
      %198 = vector.broadcast %197 : vector<32x1xf32> to vector<32x64xf32>
      %199 = arith.mulf %189, %198 : vector<32x64xf32>
      %200 = vector.broadcast %182 : vector<1x64xf32> to vector<32x64xf32>
      %201 = arith.mulf %199, %200 : vector<32x64xf32>
      %202 = vector.broadcast %183 : vector<1x64xf32> to vector<32x64xf32>
      %203 = arith.addf %201, %202 : vector<32x64xf32>
      %204 = arith.truncf %203 : vector<32x64xf32> to vector<32x64xbf16>
      %c0_69 = arith.constant 0 : index
      %c0_70 = arith.constant 0 : index
      %205 = vector.load %arg16[%c0_69, %c0_70] : memref<64x64xbf16, #tpu.memory_space<vmem>>, vector<64x64xbf16>
      %cst_71 = arith.constant dense<0.000000e+00> : vector<32x64xf32>
      %206 = tpu.matmul %204, %205, %cst_71 {dimension_numbers = #tpu.dot_dimension_numbers<[1], [0], [0], [1], [0, 0, 1, 1], [], []>} : vector<32x64xbf16>, vector<64x64xbf16>, vector<32x64xf32> -> vector<32x64xf32>
      %c0_72 = arith.constant 0 : index
      %c0_73 = arith.constant 0 : index
      %207 = vector.load %arg17[%c0_72, %c0_73] : memref<1x64xf32, #tpu.memory_space<vmem>>, vector<1x64xf32>
      %208 = vector.broadcast %207 : vector<1x64xf32> to vector<32x64xf32>
      %209 = arith.addf %206, %208 : vector<32x64xf32>
      %c0_74 = arith.constant 0 : index
      %c0_75 = arith.constant 0 : index
      %210 = vector.load %arg18[%c0_74, %c0_75] : memref<32x64xf32, #tpu.memory_space<vmem>>, vector<32x64xf32>
      tpu.vector_store %arg18[%c0_74, %c0_75], %209 {strides = array<i32>} : memref<32x64xf32, #tpu.memory_space<vmem>>, vector<32x64xf32>,
    } else {
    }
    return
  }
  func.func @transform_0(%arg0: i32, %arg1: i32) -> (i32, i32) {
    %c0_i32 = arith.constant 0 : i32
    %c0_i32_0 = arith.constant 0 : i32
    return %arg0, %c0_i32 : i32, i32
  }
  func.func @transform_1(%arg0: i32, %arg1: i32) -> (i32, i32) {
    %c0_i32 = arith.constant 0 : i32
    %c0_i32_0 = arith.constant 0 : i32
    %c0_i32_1 = arith.constant 0 : i32
    return %c0_i32, %c0_i32_0 : i32, i32
  }
  func.func @transform_2(%arg0: i32, %arg1: i32) -> (i32, i32) {
    %c0_i32 = arith.constant 0 : i32
    %c0_i32_0 = arith.constant 0 : i32
    %c0_i32_1 = arith.constant 0 : i32
    return %c0_i32, %c0_i32_0 : i32, i32
  }
  func.func @transform_3(%arg0: i32, %arg1: i32) -> (i32, i32) {
    %c0_i32 = arith.constant 0 : i32
    %c0_i32_0 = arith.constant 0 : i32
    %c0_i32_1 = arith.constant 0 : i32
    return %c0_i32, %c0_i32_0 : i32, i32
  }
  func.func @transform_4(%arg0: i32, %arg1: i32) -> (i32, i32) {
    %c0_i32 = arith.constant 0 : i32
    %c0_i32_0 = arith.constant 0 : i32
    %c0_i32_1 = arith.constant 0 : i32
    return %c0_i32, %c0_i32_0 : i32, i32
  }
  func.func @transform_5(%arg0: i32, %arg1: i32) -> (i32, i32, i32) {
    %c0_i32 = arith.constant 0 : i32
    %c0_i32_0 = arith.constant 0 : i32
    %c0_i32_1 = arith.constant 0 : i32
    return %arg1, %c0_i32, %c0_i32_0 : i32, i32, i32
  }
  func.func @transform_6(%arg0: i32, %arg1: i32) -> (i32, i32, i32) {
    %c0_i32 = arith.constant 0 : i32
    %c0_i32_0 = arith.constant 0 : i32
    %c0_i32_1 = arith.constant 0 : i32
    return %arg1, %c0_i32, %c0_i32_0 : i32, i32, i32
  }
  func.func @transform_7(%arg0: i32, %arg1: i32) -> (i32, i32, i32) {
    %c0_i32 = arith.constant 0 : i32
    %c0_i32_0 = arith.constant 0 : i32
    %c0_i32_1 = arith.constant 0 : i32
    return %arg1, %c0_i32, %c0_i32_0 : i32, i32, i32
  }
  func.func @transform_8(%arg0: i32, %arg1: i32) -> (i32, i32, i32) {
    %c0_i32 = arith.constant 0 : i32
    %c0_i32_0 = arith.constant 0 : i32
    %c0_i32_1 = arith.constant 0 : i32
    return %arg1, %c0_i32, %c0_i32_0 : i32, i32, i32
  }
  func.func @transform_9(%arg0: i32, %arg1: i32) -> (i32, i32, i32) {
    %c0_i32 = arith.constant 0 : i32
    %c0_i32_0 = arith.constant 0 : i32
    %c0_i32_1 = arith.constant 0 : i32
    return %arg1, %c0_i32, %c0_i32_0 : i32, i32, i32
  }
  func.func @transform_10(%arg0: i32, %arg1: i32) -> (i32, i32) {
    %c0_i32 = arith.constant 0 : i32
    %c0_i32_0 = arith.constant 0 : i32
    %c0_i32_1 = arith.constant 0 : i32
    return %c0_i32, %c0_i32_0 : i32, i32
  }
  func.func @transform_11(%arg0: i32, %arg1: i32) -> (i32, i32) {
    %c0_i32 = arith.constant 0 : i32
    %c0_i32_0 = arith.constant 0 : i32
    %c0_i32_1 = arith.constant 0 : i32
    return %c0_i32, %c0_i32_0 : i32, i32
  }
  func.func @transform_12(%arg0: i32, %arg1: i32) -> (i32, i32) {
    %c0_i32 = arith.constant 0 : i32
    %c0_i32_0 = arith.constant 0 : i32
    %c0_i32_1 = arith.constant 0 : i32
    return %c0_i32, %c0_i32_0 : i32, i32
  }
  func.func @transform_13(%arg0: i32, %arg1: i32) -> (i32, i32) {
    %c0_i32 = arith.constant 0 : i32
    %c0_i32_0 = arith.constant 0 : i32
    %c0_i32_1 = arith.constant 0 : i32
    return %c0_i32, %c0_i32_0 : i32, i32
  }
  func.func @transform_14(%arg0: i32, %arg1: i32) -> (i32, i32) {
    %c0_i32 = arith.constant 0 : i32
    %c0_i32_0 = arith.constant 0 : i32
    %c0_i32_1 = arith.constant 0 : i32
    return %c0_i32, %c0_i32_0 : i32, i32
  }
  func.func @transform_15(%arg0: i32, %arg1: i32) -> (i32, i32) {
    %c0_i32 = arith.constant 0 : i32
    %c0_i32_0 = arith.constant 0 : i32
    %c0_i32_1 = arith.constant 0 : i32
    return %c0_i32, %c0_i32_0 : i32, i32
  }
  func.func @transform_16(%arg0: i32, %arg1: i32) -> (i32, i32) {
    %c0_i32 = arith.constant 0 : i32
    %c0_i32_0 = arith.constant 0 : i32
    return %arg0, %c0_i32 : i32, i32
  }
}

</mosaic_0001>

<llo_original>
// kernel: vit_forward.1
$region0: #{vit_forward.1}
  #allocation0 [shape = 'u32[]', space=smem, size = 0x4, offset = 0x4, fixed_abs, tag = 'smem constant byte address 0x4 - core index']
  #allocation1 [shape = 'u32[72,128]{1,0:T(1,128)}', space=vmem, size = 0x9000, scoped, tag = 'internal scratch']
  #allocation2 [shape = 'f32[32,32]{1,0:T(8,128)}', space=vmem, size = 0x4000, scoped, tag = 'scratch operand']
  %s0 = inlined_call_operand.vmem [shape: bf16[32,64], index: 0, kind: input, shape index: {}]
  %s1 = inlined_call_operand.vmem [shape: bf16[64,32], index: 1, kind: input, shape index: {}]
  %s2 = inlined_call_operand.vmem [shape: f32[1,32], index: 2, kind: input, shape index: {}]
  %s3 = inlined_call_operand.vmem [shape: f32[32,32], index: 3, kind: input, shape index: {}]
  %s4 = inlined_call_operand.vmem [shape: f32[32,32], index: 4, kind: input, shape index: {}]
  %s5 = inlined_call_operand.vmem [shape: bf16[2,32,96], index: 5, kind: input, shape index: {}]
  %s6 = inlined_call_operand.vmem [shape: bf16[2,32,32], index: 6, kind: input, shape index: {}]
  %s7 = inlined_call_operand.vmem [shape: bf16[2,32,64], index: 7, kind: input, shape index: {}]
  %s8 = inlined_call_operand.vmem [shape: bf16[2,64,32], index: 8, kind: input, shape index: {}]
  %s9 = inlined_call_operand.vmem [shape: f32[2,8,128], index: 9, kind: input, shape index: {}]
  %s10 = inlined_call_operand.vmem [shape: bf16[32,64], index: 10, kind: input, shape index: {}]
  %s11 = inlined_call_operand.vmem [shape: f32[1,64], index: 11, kind: input, shape index: {}]
  %s12 = inlined_call_operand.vmem [shape: f32[1,64], index: 12, kind: input, shape index: {}]
  %s13 = inlined_call_operand.vmem [shape: f32[1,64], index: 13, kind: input, shape index: {}]
  %s14 = inlined_call_operand.vmem [shape: bf16[64,64], index: 14, kind: input, shape index: {}]
  %s15 = inlined_call_operand.vmem [shape: f32[1,64], index: 15, kind: input, shape index: {}]
  %s16 = inlined_call_operand.vmem [shape: f32[32,64], index: 16, kind: output, shape index: {}]
  %s17 = sld [smem:[#allocation0]]
  $region105: #{vit_forward.1} parent=0
    _
  %s19 = ssub.s32 1, %s17
  %s20 = scalar_select 0, %s19, %s17
  loop: start=0, step=1, limit=4
  $region2: #{vit_forward.1} parent=0 // loop_pre_header
    _
  $region3: #{vit_forward.1} parent=0 // loop_header
    %s22 = sphi 0, %s26
    %p23 = scmp.ge.s32.totalorder %s22, 4
    %s29 = sphi 0, %s41
    %s30 = sphi 0, %s37
    %s31 = sphi 0, %s29
    %s32 = sphi 0, %s30
    %s33 = sphi 0, %s31
    %s34 = sphi 0, %s32
    %s44 = sphi 0, %s46
    %s47 = sphi 0, %s44
    %s48 = sphi 0, %s47
    %s64 = sphi 0, %s48
    %s68 = sphi 0, %s68
    %s70 = sphi 0, %s68
    %s71 = sphi 0, %s70
    %s85 = sphi 0, %s71
    %s89 = sphi 0, %s89
    %s91 = sphi 0, %s89
    %s92 = sphi 0, %s91
    %s106 = sphi 0, %s92
    %s110 = sphi 0, %s110
    %s112 = sphi 0, %s110
    %s113 = sphi 0, %s112
    %s127 = sphi 0, %s113
    %s131 = sphi 0, %s131
    %s133 = sphi 0, %s131
    %s134 = sphi 0, %s133
    %s148 = sphi 0, %s134
    %s154 = sphi 0, %s156
    %s157 = sphi 0, %s154
    %s158 = sphi 0, %s157
    %s174 = sphi 0, %s158
    %s180 = sphi 0, %s182
    %s183 = sphi 0, %s180
    %s184 = sphi 0, %s183
    %s200 = sphi 0, %s184
    %s206 = sphi 0, %s208
    %s209 = sphi 0, %s206
    %s210 = sphi 0, %s209
    %s226 = sphi 0, %s210
    %s232 = sphi 0, %s234
    %s235 = sphi 0, %s232
    %s236 = sphi 0, %s235
    %s252 = sphi 0, %s236
    %s258 = sphi 0, %s260
    %s261 = sphi 0, %s258
    %s262 = sphi 0, %s261
    %s278 = sphi 0, %s262
    %s282 = sphi 0, %s282
    %s284 = sphi 0, %s282
    %s285 = sphi 0, %s284
    %s299 = sphi 0, %s285
    %s303 = sphi 0, %s303
    %s305 = sphi 0, %s303
    %s306 = sphi 0, %s305
    %s320 = sphi 0, %s306
    %s324 = sphi 0, %s324
    %s326 = sphi 0, %s324
    %s327 = sphi 0, %s326
    %s341 = sphi 0, %s327
    %s345 = sphi 0, %s345
    %s347 = sphi 0, %s345
    %s348 = sphi 0, %s347
    %s362 = sphi 0, %s348
    %s366 = sphi 0, %s366
    %s368 = sphi 0, %s366
    %s369 = sphi 0, %s368
    %s383 = sphi 0, %s369
    %s387 = sphi 0, %s387
    %s389 = sphi 0, %s387
    %s390 = sphi 0, %s389
    %s404 = sphi 0, %s390
    %s410 = sphi 0, %s412
    %s413 = sphi 0, %s410
    %s414 = sphi 0, %s413
    %s430 = sphi 0, %s414
  $region4: #{vit_forward.1} parent=0 // loop_header_branch
    %25 = sbr.rel (%p23) target = $region8
  $region5: #{vit_forward.1} parent=0 // loop_body
    %s27 = ssub.s32 %s22, 1
    %s28 = ssub.s32 %s22, 2
    %s35 = sadd.s32 1, %s30
    %p36 = scmp.ge.s32.totalorder %s35, 2
    %s37 = scalar_select %p36, 0, %s35
    %s38 = sadd.s32 1, %s29
    %s39 = scalar_select %p36, %s38, %s29
    %p40 = scmp.ge.s32.totalorder %s39, 1
    %s41 = scalar_select %p40, 0, %s39
    %s42 = ssub.s32 %s29, %s41
    %p43 = scmp.eq.s32.totalorder %s42, 0
    %s45 = sadd.s32 %s44, 1
    %s46 = scalar_select %p43, %s44, %s45
    %p49 = pneg %p43
    %p50 = scmp.eq.s32.totalorder %s22, 1
    %p51 = por %p49, %p50
    %p52 = scmp.ne.s32.totalorder %s44, %s47
    %p53 = scmp.eq.s32.totalorder %s22, 0
    %p54 = por %p52, %p53
    %p55 = scmp.ne.s32.totalorder %s44, %s47
    %p56 = scmp.eq.s32.totalorder %s27, 1
    %p57 = por %p55, %p56
    %p58 = scmp.ne.s32.totalorder %s47, %s48
    %p59 = scmp.eq.s32.totalorder %s27, 0
    %p60 = por %p58, %p59
    %p61 = scmp.ne.s32.totalorder %s47, %s48
    %p62 = scmp.eq.s32.totalorder %s28, 1
    %p63 = por %p61, %p62
    %p65 = scmp.ne.s32.totalorder %s48, %s64
    %p66 = scmp.eq.s32.totalorder %s28, 0
    %p67 = por %p65, %p66
    %s69 = sadd.s32 %s68, 1
    %p72 = scmp.eq.s32.totalorder %s22, 1
    %p73 = scmp.ne.s32.totalorder %s68, %s70
    %p74 = scmp.eq.s32.totalorder %s22, 0
    %p75 = por %p73, %p74
    %p76 = scmp.ne.s32.totalorder %s68, %s70
    %p77 = scmp.eq.s32.totalorder %s27, 1
    %p78 = por %p76, %p77
    %p79 = scmp.ne.s32.totalorder %s70, %s71
    %p80 = scmp.eq.s32.totalorder %s27, 0
    %p81 = por %p79, %p80
    %p82 = scmp.ne.s32.totalorder %s70, %s71
    %p83 = scmp.eq.s32.totalorder %s28, 1
    %p84 = por %p82, %p83
    %p86 = scmp.ne.s32.totalorder %s71, %s85
    %p87 = scmp.eq.s32.totalorder %s28, 0
    %p88 = por %p86, %p87
    %s90 = sadd.s32 %s89, 1
    %p93 = scmp.eq.s32.totalorder %s22, 1
    %p94 = scmp.ne.s32.totalorder %s89, %s91
    %p95 = scmp.eq.s32.totalorder %s22, 0
    %p96 = por %p94, %p95
    %p97 = scmp.ne.s32.totalorder %s89, %s91
    %p98 = scmp.eq.s32.totalorder %s27, 1
    %p99 = por %p97, %p98
    %p100 = scmp.ne.s32.totalorder %s91, %s92
    %p101 = scmp.eq.s32.totalorder %s27, 0
    %p102 = por %p100, %p101
    %p103 = scmp.ne.s32.totalorder %s91, %s92
    %p104 = scmp.eq.s32.totalorder %s28, 1
    %p105 = por %p103, %p104
    %p107 = scmp.ne.s32.totalorder %s92, %s106
    %p108 = scmp.eq.s32.totalorder %s28, 0
    %p109 = por %p107, %p108
    %s111 = sadd.s32 %s110, 1
    %p114 = scmp.eq.s32.totalorder %s22, 1
    %p115 = scmp.ne.s32.totalorder %s110, %s112
    %p116 = scmp.eq.s32.totalorder %s22, 0
    %p117 = por %p115, %p116
    %p118 = scmp.ne.s32.totalorder %s110, %s112
    %p119 = scmp.eq.s32.totalorder %s27, 1
    %p120 = por %p118, %p119
    %p121 = scmp.ne.s32.totalorder %s112, %s113
    %p122 = scmp.eq.s32.totalorder %s27, 0
    %p123 = por %p121, %p122
    %p124 = scmp.ne.s32.totalorder %s112, %s113
    %p125 = scmp.eq.s32.totalorder %s28, 1
    %p126 = por %p124, %p125
    %p128 = scmp.ne.s32.totalorder %s113, %s127
    %p129 = scmp.eq.s32.totalorder %s28, 0
    %p130 = por %p128, %p129
    %s132 = sadd.s32 %s131, 1
    %p135 = scmp.eq.s32.totalorder %s22, 1
    %p136 = scmp.ne.s32.totalorder %s131, %s133
    %p137 = scmp.eq.s32.totalorder %s22, 0
    %p138 = por %p136, %p137
    %p139 = scmp.ne.s32.totalorder %s131, %s133
    %p140 = scmp.eq.s32.totalorder %s27, 1
    %p141 = por %p139, %p140
    %p142 = scmp.ne.s32.totalorder %s133, %s134
    %p143 = scmp.eq.s32.totalorder %s27, 0
    %p144 = por %p142, %p143
    %p145 = scmp.ne.s32.totalorder %s133, %s134
    %p146 = scmp.eq.s32.totalorder %s28, 1
    %p147 = por %p145, %p146
    %p149 = scmp.ne.s32.totalorder %s134, %s148
    %p150 = scmp.eq.s32.totalorder %s28, 0
    %p151 = por %p149, %p150
    %s152 = ssub.s32 %s30, %s37
    %p153 = scmp.eq.s32.totalorder %s152, 0
    %s155 = sadd.s32 %s154, 1
    %s156 = scalar_select %p153, %s154, %s155
    %p159 = pneg %p153
    %p160 = scmp.eq.s32.totalorder %s22, 1
    %p161 = por %p159, %p160
    %p162 = scmp.ne.s32.totalorder %s154, %s157
    %p163 = scmp.eq.s32.totalorder %s22, 0
    %p164 = por %p162, %p163
    %p165 = scmp.ne.s32.totalorder %s154, %s157
    %p166 = scmp.eq.s32.totalorder %s27, 1
    %p167 = por %p165, %p166
    %p168 = scmp.ne.s32.totalorder %s157, %s158
    %p169 = scmp.eq.s32.totalorder %s27, 0
    %p170 = por %p168, %p169
    %p171 = scmp.ne.s32.totalorder %s157, %s158
    %p172 = scmp.eq.s32.totalorder %s28, 1
    %p173 = por %p171, %p172
    %p175 = scmp.ne.s32.totalorder %s158, %s174
    %p176 = scmp.eq.s32.totalorder %s28, 0
    %p177 = por %p175, %p176
    %s178 = ssub.s32 %s30, %s37
    %p179 = scmp.eq.s32.totalorder %s178, 0
    %s181 = sadd.s32 %s180, 1
    %s182 = scalar_select %p179, %s180, %s181
    %p185 = pneg %p179
    %p186 = scmp.eq.s32.totalorder %s22, 1
    %p187 = por %p185, %p186
    %p188 = scmp.ne.s32.totalorder %s180, %s183
    %p189 = scmp.eq.s32.totalorder %s22, 0
    %p190 = por %p188, %p189
    %p191 = scmp.ne.s32.totalorder %s180, %s183
    %p192 = scmp.eq.s32.totalorder %s27, 1
    %p193 = por %p191, %p192
    %p194 = scmp.ne.s32.totalorder %s183, %s184
    %p195 = scmp.eq.s32.totalorder %s27, 0
    %p196 = por %p194, %p195
    %p197 = scmp.ne.s32.totalorder %s183, %s184
    %p198 = scmp.eq.s32.totalorder %s28, 1
    %p199 = por %p197, %p198
    %p201 = scmp.ne.s32.totalorder %s184, %s200
    %p202 = scmp.eq.s32.totalorder %s28, 0
    %p203 = por %p201, %p202
    %s204 = ssub.s32 %s30, %s37
    %p205 = scmp.eq.s32.totalorder %s204, 0
    %s207 = sadd.s32 %s206, 1
    %s208 = scalar_select %p205, %s206, %s207
    %p211 = pneg %p205
    %p212 = scmp.eq.s32.totalorder %s22, 1
    %p213 = por %p211, %p212
    %p214 = scmp.ne.s32.totalorder %s206, %s209
    %p215 = scmp.eq.s32.totalorder %s22, 0
    %p216 = por %p214, %p215
    %p217 = scmp.ne.s32.totalorder %s206, %s209
    %p218 = scmp.eq.s32.totalorder %s27, 1
    %p219 = por %p217, %p218
    %p220 = scmp.ne.s32.totalorder %s209, %s210
    %p221 = scmp.eq.s32.totalorder %s27, 0
    %p222 = por %p220, %p221
    %p223 = scmp.ne.s32.totalorder %s209, %s210
    %p224 = scmp.eq.s32.totalorder %s28, 1
    %p225 = por %p223, %p224
    %p227 = scmp.ne.s32.totalorder %s210, %s226
    %p228 = scmp.eq.s32.totalorder %s28, 0
    %p229 = por %p227, %p228
    %s230 = ssub.s32 %s30, %s37
    %p231 = scmp.eq.s32.totalorder %s230, 0
    %s233 = sadd.s32 %s232, 1
    %s234 = scalar_select %p231, %s232, %s233
    %p237 = pneg %p231
    %p238 = scmp.eq.s32.totalorder %s22, 1
    %p239 = por %p237, %p238
    %p240 = scmp.ne.s32.totalorder %s232, %s235
    %p241 = scmp.eq.s32.totalorder %s22, 0
    %p242 = por %p240, %p241
    %p243 = scmp.ne.s32.totalorder %s232, %s235
    %p244 = scmp.eq.s32.totalorder %s27, 1
    %p245 = por %p243, %p244
    %p246 = scmp.ne.s32.totalorder %s235, %s236
    %p247 = scmp.eq.s32.totalorder %s27, 0
    %p248 = por %p246, %p247
    %p249 = scmp.ne.s32.totalorder %s235, %s236
    %p250 = scmp.eq.s32.totalorder %s28, 1
    %p251 = por %p249, %p250
    %p253 = scmp.ne.s32.totalorder %s236, %s252
    %p254 = scmp.eq.s32.totalorder %s28, 0
    %p255 = por %p253, %p254
    %s256 = ssub.s32 %s30, %s37
    %p257 = scmp.eq.s32.totalorder %s256, 0
    %s259 = sadd.s32 %s258, 1
    %s260 = scalar_select %p257, %s258, %s259
    %p263 = pneg %p257
    %p264 = scmp.eq.s32.totalorder %s22, 1
    %p265 = por %p263, %p264
    %p266 = scmp.ne.s32.totalorder %s258, %s261
    %p267 = scmp.eq.s32.totalorder %s22, 0
    %p268 = por %p266, %p267
    %p269 = scmp.ne.s32.totalorder %s258, %s261
    %p270 = scmp.eq.s32.totalorder %s27, 1
    %p271 = por %p269, %p270
    %p272 = scmp.ne.s32.totalorder %s261, %s262
    %p273 = scmp.eq.s32.totalorder %s27, 0
    %p274 = por %p272, %p273
    %p275 = scmp.ne.s32.totalorder %s261, %s262
    %p276 = scmp.eq.s32.totalorder %s28, 1
    %p277 = por %p275, %p276
    %p279 = scmp.ne.s32.totalorder %s262, %s278
    %p280 = scmp.eq.s32.totalorder %s28, 0
    %p281 = por %p279, %p280
    %s283 = sadd.s32 %s282, 1
    %p286 = scmp.eq.s32.totalorder %s22, 1
    %p287 = scmp.ne.s32.totalorder %s282, %s284
    %p288 = scmp.eq.s32.totalorder %s22, 0
    %p289 = por %p287, %p288
    %p290 = scmp.ne.s32.totalorder %s282, %s284
    %p291 = scmp.eq.s32.totalorder %s27, 1
    %p292 = por %p290, %p291
    %p293 = scmp.ne.s32.totalorder %s284, %s285
    %p294 = scmp.eq.s32.totalorder %s27, 0
    %p295 = por %p293, %p294
    %p296 = scmp.ne.s32.totalorder %s284, %s285
    %p297 = scmp.eq.s32.totalorder %s28, 1
    %p298 = por %p296, %p297
    %p300 = scmp.ne.s32.totalorder %s285, %s299
    %p301 = scmp.eq.s32.totalorder %s28, 0
    %p302 = por %p300, %p301
    %s304 = sadd.s32 %s303, 1
    %p307 = scmp.eq.s32.totalorder %s22, 1
    %p308 = scmp.ne.s32.totalorder %s303, %s305
    %p309 = scmp.eq.s32.totalorder %s22, 0
    %p310 = por %p308, %p309
    %p311 = scmp.ne.s32.totalorder %s303, %s305
    %p312 = scmp.eq.s32.totalorder %s27, 1
    %p313 = por %p311, %p312
    %p314 = scmp.ne.s32.totalorder %s305, %s306
    %p315 = scmp.eq.s32.totalorder %s27, 0
    %p316 = por %p314, %p315
    %p317 = scmp.ne.s32.totalorder %s305, %s306
    %p318 = scmp.eq.s32.totalorder %s28, 1
    %p319 = por %p317, %p318
    %p321 = scmp.ne.s32.totalorder %s306, %s320
    %p322 = scmp.eq.s32.totalorder %s28, 0
    %p323 = por %p321, %p322
    %s325 = sadd.s32 %s324, 1
    %p328 = scmp.eq.s32.totalorder %s22, 1
    %p329 = scmp.ne.s32.totalorder %s324, %s326
    %p330 = scmp.eq.s32.totalorder %s22, 0
    %p331 = por %p329, %p330
    %p332 = scmp.ne.s32.totalorder %s324, %s326
    %p333 = scmp.eq.s32.totalorder %s27, 1
    %p334 = por %p332, %p333
    %p335 = scmp.ne.s32.totalorder %s326, %s327
    %p336 = scmp.eq.s32.totalorder %s27, 0
    %p337 = por %p335, %p336
    %p338 = scmp.ne.s32.totalorder %s326, %s327
    %p339 = scmp.eq.s32.totalorder %s28, 1
    %p340 = por %p338, %p339
    %p342 = scmp.ne.s32.totalorder %s327, %s341
    %p343 = scmp.eq.s32.totalorder %s28, 0
    %p344 = por %p342, %p343
    %s346 = sadd.s32 %s345, 1
    %p349 = scmp.eq.s32.totalorder %s22, 1
    %p350 = scmp.ne.s32.totalorder %s345, %s347
    %p351 = scmp.eq.s32.totalorder %s22, 0
    %p352 = por %p350, %p351
    %p353 = scmp.ne.s32.totalorder %s345, %s347
    %p354 = scmp.eq.s32.totalorder %s27, 1
    %p355 = por %p353, %p354
    %p356 = scmp.ne.s32.totalorder %s347, %s348
    %p357 = scmp.eq.s32.totalorder %s27, 0
    %p358 = por %p356, %p357
    %p359 = scmp.ne.s32.totalorder %s347, %s348
    %p360 = scmp.eq.s32.totalorder %s28, 1
    %p361 = por %p359, %p360
    %p363 = scmp.ne.s32.totalorder %s348, %s362
    %p364 = scmp.eq.s32.totalorder %s28, 0
    %p365 = por %p363, %p364
    %s367 = sadd.s32 %s366, 1
    %p370 = scmp.eq.s32.totalorder %s22, 1
    %p371 = scmp.ne.s32.totalorder %s366, %s368
    %p372 = scmp.eq.s32.totalorder %s22, 0
    %p373 = por %p371, %p372
    %p374 = scmp.ne.s32.totalorder %s366, %s368
    %p375 = scmp.eq.s32.totalorder %s27, 1
    %p376 = por %p374, %p375
    %p377 = scmp.ne.s32.totalorder %s368, %s369
    %p378 = scmp.eq.s32.totalorder %s27, 0
    %p379 = por %p377, %p378
    %p380 = scmp.ne.s32.totalorder %s368, %s369
    %p381 = scmp.eq.s32.totalorder %s28, 1
    %p382 = por %p380, %p381
    %p384 = scmp.ne.s32.totalorder %s369, %s383
    %p385 = scmp.eq.s32.totalorder %s28, 0
    %p386 = por %p384, %p385
    %s388 = sadd.s32 %s387, 1
    %p391 = scmp.eq.s32.totalorder %s22, 1
    %p392 = scmp.ne.s32.totalorder %s387, %s389
    %p393 = scmp.eq.s32.totalorder %s22, 0
    %p394 = por %p392, %p393
    %p395 = scmp.ne.s32.totalorder %s387, %s389
    %p396 = scmp.eq.s32.totalorder %s27, 1
    %p397 = por %p395, %p396
    %p398 = scmp.ne.s32.totalorder %s389, %s390
    %p399 = scmp.eq.s32.totalorder %s27, 0
    %p400 = por %p398, %p399
    %p401 = scmp.ne.s32.totalorder %s389, %s390
    %p402 = scmp.eq.s32.totalorder %s28, 1
    %p403 = por %p401, %p402
    %p405 = scmp.ne.s32.totalorder %s390, %s404
    %p406 = scmp.eq.s32.totalorder %s28, 0
    %p407 = por %p405, %p406
    %s408 = ssub.s32 %s29, %s41
    %p409 = scmp.eq.s32.totalorder %s408, 0
    %s411 = sadd.s32 %s410, 1
    %s412 = scalar_select %p409, %s410, %s411
    %p415 = pneg %p409
    %p416 = scmp.eq.s32.totalorder %s22, 1
    %p417 = por %p415, %p416
    %p418 = scmp.ne.s32.totalorder %s410, %s413
    %p419 = scmp.eq.s32.totalorder %s22, 0
    %p420 = por %p418, %p419
    %p421 = scmp.ne.s32.totalorder %s410, %s413
    %p422 = scmp.eq.s32.totalorder %s27, 1
    %p423 = por %p421, %p422
    %p424 = scmp.ne.s32.totalorder %s413, %s414
    %p425 = scmp.eq.s32.totalorder %s27, 0
    %p426 = por %p424, %p425
    %p427 = scmp.ne.s32.totalorder %s413, %s414
    %p428 = scmp.eq.s32.totalorder %s28, 1
    %p429 = por %p427, %p428
    %p431 = scmp.ne.s32.totalorder %s414, %s430
    %p432 = scmp.eq.s32.totalorder %s28, 0
    %p433 = por %p431, %p432
    %p434 = scmp.le.s32.totalorder 1, %s22
    %p435 = scmp.lt.s32.totalorder %s22, 3
    %p436 = pnand %p434, %p435
    %p437 = pneg %p436
    // Predicated region
    $region9: #{vit_forward.1} parent=5 // pred_check
      _
    $region10: #{vit_forward.1} parent=5 // pred_check_branch
      %439 = sbr.rel (%p436) target = $region12
    $region11: #{vit_forward.1} parent=5 // pred_region
      %s440 = ssub.s32 %s22, 1
      // Predicated region
      $region13: #{vit_forward.1} parent=11 // pred_check
        %p441 = pneg %p60
      $region14: #{vit_forward.1} parent=11 // pred_check_branch
        %443 = sbr.rel (%p441) target = $region16
      $region15: #{vit_forward.1} parent=11 // pred_region
        %s444 = smul.u32 4, %s31
        %p445 = scmp.lt.s32.totalorder %s444, 3
        %s446 = scalar_select %p445, %s444, 3
        %s447 = smul.addr %s446, 4
        %s448 = scalar_lea.vmem %s0, %s447
        %s449 = smul.u32 4, %s31
      $region16: #{vit_forward.1} parent=11 // pred_fallthru
        _
      // Predicated region
      $region17: #{vit_forward.1} parent=11 // pred_check
        %p450 = pneg %p81
      $region18: #{vit_forward.1} parent=11 // pred_check_branch
        %452 = sbr.rel (%p450) target = $region20
      $region19: #{vit_forward.1} parent=11 // pred_region
        _
      $region20: #{vit_forward.1} parent=11 // pred_fallthru
        _
      // Predicated region
      $region21: #{vit_forward.1} parent=11 // pred_check
        %p453 = pneg %p102
      $region22: #{vit_forward.1} parent=11 // pred_check_branch
        %455 = sbr.rel (%p453) target = $region24
      $region23: #{vit_forward.1} parent=11 // pred_region
        _
      $region24: #{vit_forward.1} parent=11 // pred_fallthru
        _
      // Predicated region
      $region25: #{vit_forward.1} parent=11 // pred_check
        %p456 = pneg %p123
      $region26: #{vit_forward.1} parent=11 // pred_check_branch
        %458 = sbr.rel (%p456) target = $region28
      $region27: #{vit_forward.1} parent=11 // pred_region
        _
      $region28: #{vit_forward.1} parent=11 // pred_fallthru
        _
      // Predicated region
      $region29: #{vit_forward.1} parent=11 // pred_check
        %p459 = pneg %p144
      $region30: #{vit_forward.1} parent=11 // pred_check_branch
        %461 = sbr.rel (%p459) target = $region32
      $region31: #{vit_forward.1} parent=11 // pred_region
        _
      $region32: #{vit_forward.1} parent=11 // pred_fallthru
        _
      // Predicated region
      $region33: #{vit_forward.1} parent=11 // pred_check
        %p462 = pneg %p295
      $region34: #{vit_forward.1} parent=11 // pred_check_branch
        %464 = sbr.rel (%p462) target = $region36
      $region35: #{vit_forward.1} parent=11 // pred_region
        _
      $region36: #{vit_forward.1} parent=11 // pred_fallthru
        _
      // Predicated region
      $region37: #{vit_forward.1} parent=11 // pred_check
        %p465 = pneg %p316
      $region38: #{vit_forward.1} parent=11 // pred_check_branch
        %467 = sbr.rel (%p465) target = $region40
      $region39: #{vit_forward.1} parent=11 // pred_region
        _
      $region40: #{vit_forward.1} parent=11 // pred_fallthru
        _
      // Predicated region
      $region41: #{vit_forward.1} parent=11 // pred_check
        %p468 = pneg %p337
      $region42: #{vit_forward.1} parent=11 // pred_check_branch
        %470 = sbr.rel (%p468) target = $region44
      $region43: #{vit_forward.1} parent=11 // pred_region
        _
      $region44: #{vit_forward.1} parent=11 // pred_fallthru
        _
      // Predicated region
      $region45: #{vit_forward.1} parent=11 // pred_check
        %p471 = pneg %p358
      $region46: #{vit_forward.1} parent=11 // pred_check_branch
        %473 = sbr.rel (%p471) target = $region48
      $region47: #{vit_forward.1} parent=11 // pred_region
        _
      $region48: #{vit_forward.1} parent=11 // pred_fallthru
        _
      // Predicated region
      $region49: #{vit_forward.1} parent=11 // pred_check
        %p474 = pneg %p379
      $region50: #{vit_forward.1} parent=11 // pred_check_branch
        %476 = sbr.rel (%p474) target = $region52
      $region51: #{vit_forward.1} parent=11 // pred_region
        _
      $region52: #{vit_forward.1} parent=11 // pred_fallthru
        _
      // Predicated region
      $region53: #{vit_forward.1} parent=11 // pred_check
        %p477 = pneg %p400
      $region54: #{vit_forward.1} parent=11 // pred_check_branch
        %479 = sbr.rel (%p477) target = $region56
      $region55: #{vit_forward.1} parent=11 // pred_region
        _
      $region56: #{vit_forward.1} parent=11 // pred_fallthru
        _
    $region12: #{vit_forward.1} parent=5 // pred_fallthru
      _
    %p480 = scmp.lt.s32.totalorder %s22, 2
    // Predicated region
    $region57: #{vit_forward.1} parent=5 // pred_check
      %p481 = pneg %p480
    $region58: #{vit_forward.1} parent=5 // pred_check_branch
      %483 = sbr.rel (%p481) target = $region60
    $region59: #{vit_forward.1} parent=5 // pred_region
      // Predicated region
      $region61: #{vit_forward.1} parent=59 // pred_check
        %p484 = pneg %p164
      $region62: #{vit_forward.1} parent=59 // pred_check_branch
        %486 = sbr.rel (%p484) target = $region64
      $region63: #{vit_forward.1} parent=59 // pred_region
        %p487 = scmp.lt.s32.totalorder %s30, 1
        %s488 = scalar_select %p487, %s30, 1
        %s489 = smul.addr %s488, 4
        %s490 = smul.addr %s489, 4
        %s491 = scalar_lea.vmem %s5, %s490
      $region64: #{vit_forward.1} parent=59 // pred_fallthru
        _
      // Predicated region
      $region65: #{vit_forward.1} parent=59 // pred_check
        %p492 = pneg %p190
      $region66: #{vit_forward.1} parent=59 // pred_check_branch
        %494 = sbr.rel (%p492) target = $region68
      $region67: #{vit_forward.1} parent=59 // pred_region
        %p495 = scmp.lt.s32.totalorder %s30, 1
        %s496 = scalar_select %p495, %s30, 1
        %s497 = smul.addr %s496, 4
        %s498 = smul.addr %s497, 4
        %s499 = scalar_lea.vmem %s6, %s498
      $region68: #{vit_forward.1} parent=59 // pred_fallthru
        _
      // Predicated region
      $region69: #{vit_forward.1} parent=59 // pred_check
        %p500 = pneg %p216
      $region70: #{vit_forward.1} parent=59 // pred_check_branch
        %502 = sbr.rel (%p500) target = $region72
      $region71: #{vit_forward.1} parent=59 // pred_region
        %p503 = scmp.lt.s32.totalorder %s30, 1
        %s504 = scalar_select %p503, %s30, 1
        %s505 = smul.addr %s504, 4
        %s506 = smul.addr %s505, 4
        %s507 = scalar_lea.vmem %s7, %s506
      $region72: #{vit_forward.1} parent=59 // pred_fallthru
        _
      // Predicated region
      $region73: #{vit_forward.1} parent=59 // pred_check
        %p508 = pneg %p242
      $region74: #{vit_forward.1} parent=59 // pred_check_branch
        %510 = sbr.rel (%p508) target = $region76
      $region75: #{vit_forward.1} parent=59 // pred_region
        %p511 = scmp.lt.s32.totalorder %s30, 1
        %s512 = scalar_select %p511, %s30, 1
        %s513 = smul.addr %s512, 8
        %s514 = smul.addr %s513, 4
        %s515 = scalar_lea.vmem %s8, %s514
      $region76: #{vit_forward.1} parent=59 // pred_fallthru
        _
      // Predicated region
      $region77: #{vit_forward.1} parent=59 // pred_check
        %p516 = pneg %p268
      $region78: #{vit_forward.1} parent=59 // pred_check_branch
        %518 = sbr.rel (%p516) target = $region80
      $region79: #{vit_forward.1} parent=59 // pred_region
        %p519 = scmp.lt.s32.totalorder %s30, 1
        %s520 = scalar_select %p519, %s30, 1
        %s521 = smul.addr %s520, 8
        %s522 = scalar_lea.vmem %s9, %s521
      $region80: #{vit_forward.1} parent=59 // pred_fallthru
        _
    $region60: #{vit_forward.1} parent=5 // pred_fallthru
      _
    %p523 = scmp.le.s32.totalorder 1, %s22
    %p524 = scmp.lt.s32.totalorder %s22, 3
    %p525 = pnand %p523, %p524
    %p526 = pneg %p525
    // Predicated region
    $region81: #{vit_forward.1} parent=5 // pred_check
      _
    $region82: #{vit_forward.1} parent=5 // pred_check_branch
      %528 = sbr.rel (%p525) target = $region84
    $region83: #{vit_forward.1} parent=5 // pred_region
      %s529 = ssub.s32 %s22, 1
      %s530 = smul.u32 4, %s31
      %p531 = scmp.lt.s32.totalorder %s530, 3
      %s532 = scalar_select %p531, %s530, 3
      %s533 = smul.addr %s532, 4
      %s534 = scalar_lea.vmem %s0, %s533
      %p535 = pneg %p60
      %p536 = pneg %p57
      %p537 = pneg %p81
      %p538 = pneg %p78
      %p539 = pneg %p102
      %p540 = pneg %p99
      %p541 = pneg %p123
      %p542 = pneg %p120
      %p543 = pneg %p144
      %p544 = pneg %p141
      %p545 = scmp.lt.s32.totalorder %s32, 1
      %s546 = scalar_select %p545, %s32, 1
      %s547 = smul.addr %s546, 4
      %s548 = smul.addr %s547, 4
      %s549 = scalar_lea.vmem %s5, %s548
      %p550 = pneg %p170
      %p551 = pneg %p167
      %p552 = scmp.lt.s32.totalorder %s32, 1
      %s553 = scalar_select %p552, %s32, 1
      %s554 = smul.addr %s553, 4
      %s555 = smul.addr %s554, 4
      %s556 = scalar_lea.vmem %s6, %s555
      %p557 = pneg %p196
      %p558 = pneg %p193
      %p559 = scmp.lt.s32.totalorder %s32, 1
      %s560 = scalar_select %p559, %s32, 1
      %s561 = smul.addr %s560, 4
      %s562 = smul.addr %s561, 4
      %s563 = scalar_lea.vmem %s7, %s562
      %p564 = pneg %p222
      %p565 = pneg %p219
      %p566 = scmp.lt.s32.totalorder %s32, 1
      %s567 = scalar_select %p566, %s32, 1
      %s568 = smul.addr %s567, 8
      %s569 = smul.addr %s568, 4
      %s570 = scalar_lea.vmem %s8, %s569
      %p571 = pneg %p248
      %p572 = pneg %p245
      %p573 = scmp.lt.s32.totalorder %s32, 1
      %s574 = scalar_select %p573, %s32, 1
      %s575 = smul.addr %s574, 8
      %s576 = scalar_lea.vmem %s9, %s575
      %p577 = pneg %p274
      %p578 = pneg %p271
      %p579 = pneg %p295
      %p580 = pneg %p292
      %p581 = pneg %p316
      %p582 = pneg %p313
      %p583 = pneg %p337
      %p584 = pneg %p334
      %p585 = pneg %p358
      %p586 = pneg %p355
      %p587 = pneg %p379
      %p588 = pneg %p376
      %p589 = pneg %p400
      %p590 = pneg %p397
      %p591 = pneg %p426
      %p592 = pneg %p423
      %s593 = smul.u32 4, %s31
      %p594 = scmp.lt.s32.totalorder %s593, 3
      %s595 = scalar_select %p594, %s593, 3
      %s596 = smul.addr %s595, 8
      %s597 = scalar_lea.vmem %s16, %s596
      %s598 = smul.u32 4, %s31
      %p599 = scmp.lt.s32.totalorder %s598, 3
      %s600 = scalar_select %p599, %s598, 3
      %s601 = smul.addr %s600, 4
      %s602 = scalar_lea.vmem %s0, %s601
      %s603 = smul.u32 4, %s31
      %p604 = scmp.lt.s32.totalorder %s32, 1
      %s605 = scalar_select %p604, %s32, 1
      %s606 = smul.addr %s605, 4
      %s607 = smul.addr %s606, 4
      %s608 = scalar_lea.vmem %s5, %s607
      %p609 = scmp.lt.s32.totalorder %s32, 1
      %s610 = scalar_select %p609, %s32, 1
      %s611 = smul.addr %s610, 4
      %s612 = smul.addr %s611, 4
      %s613 = scalar_lea.vmem %s6, %s612
      %p614 = scmp.lt.s32.totalorder %s32, 1
      %s615 = scalar_select %p614, %s32, 1
      %s616 = smul.addr %s615, 4
      %s617 = smul.addr %s616, 4
      %s618 = scalar_lea.vmem %s7, %s617
      %p619 = scmp.lt.s32.totalorder %s32, 1
      %s620 = scalar_select %p619, %s32, 1
      %s621 = smul.addr %s620, 8
      %s622 = smul.addr %s621, 4
      %s623 = scalar_lea.vmem %s8, %s622
      %p624 = scmp.lt.s32.totalorder %s32, 1
      %s625 = scalar_select %p624, %s32, 1
      %s626 = smul.addr %s625, 8
      %s627 = scalar_lea.vmem %s9, %s626
      %s628 = smul.u32 4, %s31
      %p629 = scmp.lt.s32.totalorder %s628, 3
      %s630 = scalar_select %p629, %s628, 3
      %s631 = smul.addr %s630, 8
      %s632 = scalar_lea.vmem %s16, %s631
      %s633 = smul.u32 4, %s31
      %p635 = scmp.eq.s32.totalorder %s32, 0
      // Predicated region
      $region85: #{vit_forward.1} parent=83 // pred_check
        %p636 = pneg %p635
      $region86: #{vit_forward.1} parent=83 // pred_check_branch
        %638 = sbr.rel (%p636) target = $region88
      $region87: #{vit_forward.1} parent=83 // pred_region
        %v639 = vld [vmem:[%s602] sm:$0xf]
        %v640 = vld [vmem:[%s602 + $0x4] sm:$0xf]
        %v641 = vld [vmem:[%s602 + $0x8] sm:$0xf]
        %v642 = vld [vmem:[%s602 + $0xc] sm:$0xf]
        %v643 = vld [vmem:[%s1] sm:$0xf]
        %v644 = vld [vmem:[%s1 + $0x4] sm:$0xf]
        %v645 = vld [vmem:[%s1 + $0x8] sm:$0xf]
        %v646 = vld [vmem:[%s1 + $0xc] sm:$0xf]
        %v647 = vld [vmem:[%s1 + $0x10] sm:$0xf]
        %v648 = vld [vmem:[%s1 + $0x14] sm:$0xf]
        %v649 = vld [vmem:[%s1 + $0x18] sm:$0xf]
        %v650 = vld [vmem:[%s1 + $0x1c] sm:$0xf]
        %v651 = vld [vmem:[%s2] sm:$0x1]
        %v653 = vperm.slane %v651, 0
        %v659 = vunpack.c.l.b16 %v639
        %v660 = vunpack.c.l.b16 %v640
        %v661 = vunpack.c.l.b16 %v641
        %v662 = vunpack.c.l.b16 %v642
        %v663 = vpack.c.b16 %v660, %v659
        %v664 = vpack.c.b16 %v662, %v661
        %v673 = vunpack.c.l.b16 %v643
        %v674 = vunpack.c.l.b16 %v644
        %v675 = vunpack.c.l.b16 %v645
        %v676 = vunpack.c.l.b16 %v646
        %v677 = vunpack.c.l.b16 %v647
        %v678 = vunpack.c.l.b16 %v648
        %v679 = vunpack.c.l.b16 %v649
        %v680 = vunpack.c.l.b16 %v650
        %v681 = vpack.c.b16 %v674, %v673
        %v682 = vpack.c.b16 %v676, %v675
        %v683 = vpack.c.b16 %v678, %v677
        %v684 = vpack.c.b16 %v680, %v679
        %vm689 = vcmask 523264
        %v691 = vsel %vm689, %v663, 0
        %v694 = vsel %vm689, %v664, 0
        %696 = vmatpush.bf16.msra.mxu0 0
        %697 = vmatpush.bf16.msra.mxu0 0
        %698 = vmatpush.bf16.msra.mxu0 0
        %699 = vmatpush.bf16.msra.mxu0 0
        %700 = vmatpush.bf16.msra.mxu0 %v684
        %701 = vmatpush.bf16.msra.mxu0 %v683
        %702 = vmatpush.bf16.msra.mxu0 %v682
        %703 = vmatpush.bf16.msra.mxu0 %v681
        %704 = vmatmul.bf16.gmra.mxu0 %v691
        %v705 = vpop.f32.mrf.mxu0
        %v706 = vadd.f32 %v653, %v705
        %v707 = vpop.f32.mrf.mxu0
        %v708 = vadd.f32 %v653, %v707
        %709 = vmatmul.bf16.gmra.mxu0 %v694
        %v710 = vpop.f32.mrf.mxu0
        %v711 = vadd.f32 %v653, %v710
        %v712 = vpop.f32.mrf.mxu0
        %v713 = vadd.f32 %v653, %v712
        %714 = vdwg.mxu0
        %v715 = vld [vmem:[%s3] sm:$0xff]
        %v716 = vld [vmem:[%s3 + $0x8] sm:$0xff]
        %v717 = vld [vmem:[%s3 + $0x10] sm:$0xff]
        %v718 = vld [vmem:[%s3 + $0x18] sm:$0xff]
        %v719 = vadd.f32 %v706, %v715
        %v720 = vadd.f32 %v708, %v716
        %v721 = vadd.f32 %v711, %v717
        %v722 = vadd.f32 %v713, %v718
        %vm723 = vcmask 261120
        %724 = vst.msk [vmem:[#allocation2] sm:$0xff] %vm723, %v719
        %725 = vst.msk [vmem:[#allocation2 + $0x8] sm:$0xff] %vm723, %v720
        %726 = vst.msk [vmem:[#allocation2 + $0x10] sm:$0xff] %vm723, %v721
        %727 = vst.msk [vmem:[#allocation2 + $0x18] sm:$0xff] %vm723, %v722
      $region88: #{vit_forward.1} parent=83 // pred_fallthru
        _
      %v728 = vld [vmem:[#allocation2] sm:$0xff]
      %v729 = vld [vmem:[#allocation2 + $0x8] sm:$0xff]
      %v730 = vld [vmem:[#allocation2 + $0x10] sm:$0xff]
      %v731 = vld [vmem:[#allocation2 + $0x18] sm:$0xff]
      %v732 = vld [vmem:[%s627] sm:$0xff]
      %vm733 = vcmask 261120
      %v734 = vsel %vm733, %v728, 0.0
      %735 = vadd.xlane.f32.xlu0 %v734
      %v736 = vpop.xlane.xlu0 %735
      %v737 = vsel %vm733, %v729, 0.0
      %738 = vadd.xlane.f32.xlu0 %v737
      %v739 = vpop.xlane.xlu0 %738
      %v740 = vsel %vm733, %v730, 0.0
      %741 = vadd.xlane.f32.xlu0 %v740
      %v742 = vpop.xlane.xlu0 %741
      %v743 = vsel %vm733, %v731, 0.0
      %744 = vadd.xlane.f32.xlu0 %v743
      %v745 = vpop.xlane.xlu0 %744
      %v746 = vrcp.pop 32.0
      %v747 = vmul.f32 32.0, %v746
      %v748 = vsub.f32 1.0, %v747
      %v749 = vmul.f32 %v746, %v748
      %v750 = vadd.f32 %v746, %v749
      %vm751 = vweird.f32 %v746
      %v752 = vsel %vm751, %v746, %v750
      %v753 = vmul.f32 %v736, %v752
      %v754 = vmul.f32 %v739, %v752
      %v755 = vmul.f32 %v742, %v752
      %v756 = vmul.f32 %v745, %v752
      %v757 = vsub.f32 %v728, %v753
      %v758 = vsub.f32 %v729, %v754
      %v759 = vsub.f32 %v730, %v755
      %v760 = vsub.f32 %v731, %v756
      %v761 = vmul.f32 %v757, %v757
      %v762 = vmul.f32 %v758, %v758
      %v763 = vmul.f32 %v759, %v759
      %v764 = vmul.f32 %v760, %v760
      %v765 = vsel %vm733, %v761, 0.0
      %766 = vadd.xlane.f32.xlu0 %v765
      %v767 = vpop.xlane.xlu0 %766
      %v768 = vsel %vm733, %v762, 0.0
      %769 = vadd.xlane.f32.xlu0 %v768
      %v770 = vpop.xlane.xlu0 %769
      %v771 = vsel %vm733, %v763, 0.0
      %772 = vadd.xlane.f32.xlu0 %v771
      %v773 = vpop.xlane.xlu0 %772
      %v774 = vsel %vm733, %v764, 0.0
      %775 = vadd.xlane.f32.xlu0 %v774
      %v776 = vpop.xlane.xlu0 %775
      %v777 = vmul.f32 %v767, %v752
      %v778 = vmul.f32 %v770, %v752
      %v779 = vmul.f32 %v773, %v752
      %v780 = vmul.f32 %v776, %v752
      %v781 = vadd.f32 %v777, 1e-05
      %v782 = vadd.f32 %v778, 1e-05
      %v783 = vadd.f32 %v779, 1e-05
      %v784 = vadd.f32 %v780, 1e-05
      %v785 = vrsqrt.pop %v781
      %v786 = vmul.f32 %v785, %v781
      %v787 = vmul.f32 %v786, %v785
      %v788 = vmul.f32 0.5, %v787
      %v789 = vsub.f32 1.5, %v788
      %v790 = vmul.f32 %v785, %v789
      %vm791 = vweird.f32 %v781
      %vm792 = vweird.f32 %v785
      %vm793 = vmor %vm791, %vm792
      %v794 = vsel %vm793, %v785, %v790
      %v795 = vrsqrt.pop %v782
      %v796 = vmul.f32 %v795, %v782
      %v797 = vmul.f32 %v796, %v795
      %v798 = vmul.f32 0.5, %v797
      %v799 = vsub.f32 1.5, %v798
      %v800 = vmul.f32 %v795, %v799
      %vm801 = vweird.f32 %v782
      %vm802 = vweird.f32 %v795
      %vm803 = vmor %vm801, %vm802
      %v804 = vsel %vm803, %v795, %v800
      %v805 = vrsqrt.pop %v783
      %v806 = vmul.f32 %v805, %v783
      %v807 = vmul.f32 %v806, %v805
      %v808 = vmul.f32 0.5, %v807
      %v809 = vsub.f32 1.5, %v808
      %v810 = vmul.f32 %v805, %v809
      %vm811 = vweird.f32 %v783
      %vm812 = vweird.f32 %v805
      %vm813 = vmor %vm811, %vm812
      %v814 = vsel %vm813, %v805, %v810
      %v815 = vrsqrt.pop %v784
      %v816 = vmul.f32 %v815, %v784
      %v817 = vmul.f32 %v816, %v815
      %v818 = vmul.f32 0.5, %v817
      %v819 = vsub.f32 1.5, %v818
      %v820 = vmul.f32 %v815, %v819
      %vm821 = vweird.f32 %v784
      %vm822 = vweird.f32 %v815
      %vm823 = vmor %vm821, %vm822
      %v824 = vsel %vm823, %v815, %v820
      %v825 = vmul.f32 %v757, %v794
      %v826 = vmul.f32 %v758, %v804
      %v827 = vmul.f32 %v759, %v814
      %v828 = vmul.f32 %v760, %v824
      %v829 = vperm.slane %v732, 0
      %v830 = vmul.f32 %v825, %v829
      %v831 = vmul.f32 %v826, %v829
      %v832 = vmul.f32 %v827, %v829
      %v833 = vmul.f32 %v828, %v829
      %v834 = vperm.slane %v732, 1
      %v835 = vadd.f32 %v830, %v834
      %v836 = vadd.f32 %v831, %v834
      %v837 = vadd.f32 %v832, %v834
      %v838 = vadd.f32 %v833, %v834
      %v839 = vpack.c.bf16 %v836, %v835
      %v840 = vpack.c.bf16 %v838, %v837
      %v841 = vld [vmem:[%s608] sm:$0xf]
      %v842 = vld [vmem:[%s608 + $0x4] sm:$0xf]
      %v843 = vld [vmem:[%s608 + $0x8] sm:$0xf]
      %v844 = vld [vmem:[%s608 + $0xc] sm:$0xf]
      %v849 = vunpack.c.l.b16 %v841
      %v850 = vunpack.c.l.b16 %v842
      %v851 = vunpack.c.l.b16 %v843
      %v852 = vunpack.c.l.b16 %v844
      %v853 = vpack.c.b16 %v850, %v849
      %v854 = vpack.c.b16 %v852, %v851
      %v858 = vsel %vm733, %v839, 0
      %v861 = vsel %vm733, %v840, 0
      %863 = vmatpush.bf16.msra.mxu0 0
      %864 = vmatpush.bf16.msra.mxu0 0
      %865 = vmatpush.bf16.msra.mxu0 0
      %866 = vmatpush.bf16.msra.mxu0 0
      %867 = vmatpush.bf16.msra.mxu0 0
      %868 = vmatpush.bf16.msra.mxu0 0
      %869 = vmatpush.bf16.msra.mxu0 %v854
      %870 = vmatpush.bf16.msra.mxu0 %v853
      %871 = vmatmul.bf16.gmra.mxu0 %v858
      %v872 = vpop.f32.mrf.mxu0
      %v873 = vadd.f32 0.0, %v872
      %v874 = vpop.f32.mrf.mxu0
      %v875 = vadd.f32 0.0, %v874
      %876 = vmatmul.bf16.gmra.mxu0 %v861
      %v877 = vpop.f32.mrf.mxu0
      %v878 = vadd.f32 0.0, %v877
      %v879 = vpop.f32.mrf.mxu0
      %v880 = vadd.f32 0.0, %v879
      %881 = vdwg.mxu0
      %v882 = vpack.c.bf16 %v873, %v873
      %v883 = vpack.c.bf16 %v875, %v875
      %v884 = vpack.c.bf16 %v878, %v878
      %v885 = vpack.c.bf16 %v880, %v880
      %890 = vrot.lane.b32.xlu0 %v882, 120
      %v891 = vpop.permute.xlu0 %890
      %892 = vrot.lane.b32.xlu0 %v883, 120
      %v893 = vpop.permute.xlu0 %892
      %894 = vrot.lane.b32.xlu0 %v884, 120
      %v895 = vpop.permute.xlu0 %894
      %896 = vrot.lane.b32.xlu0 %v885, 120
      %v897 = vpop.permute.xlu0 %896
      %898 = vrot.lane.b32.xlu0 %v882, 112
      %v899 = vpop.permute.xlu0 %898
      %900 = vrot.lane.b32.xlu0 %v883, 112
      %v901 = vpop.permute.xlu0 %900
      %902 = vrot.lane.b32.xlu0 %v884, 112
      %v903 = vpop.permute.xlu0 %902
      %904 = vrot.lane.b32.xlu0 %v885, 112
      %v905 = vpop.permute.xlu0 %904
      %906 = vrot.lane.b32.xlu0 %v882, 104
      %v907 = vpop.permute.xlu0 %906
      %908 = vrot.lane.b32.xlu0 %v883, 104
      %v909 = vpop.permute.xlu0 %908
      %910 = vrot.lane.b32.xlu0 %v884, 104
      %v911 = vpop.permute.xlu0 %910
      %912 = vrot.lane.b32.xlu0 %v885, 104
      %v913 = vpop.permute.xlu0 %912
      %v914 = vld [vmem:[%s4] sm:$0xff]
      %v915 = vld [vmem:[%s4 + $0x8] sm:$0xff]
      %v916 = vld [vmem:[%s4 + $0x10] sm:$0xff]
      %v917 = vld [vmem:[%s4 + $0x18] sm:$0xff]
      %v918 = vunpack.c.l.b16 %v882
      %v919 = vunpack.c.l.b16 %v883
      %v920 = vunpack.c.l.b16 %v884
      %v921 = vunpack.c.l.b16 %v885
      %v922 = vpack.c.b16 %v919, %v918
      %v923 = vpack.c.b16 %v921, %v920
      %924 = vrot.lane.b32.xlu0 %v922, 96
      %v925 = vpop.permute.xlu0 %924
      %926 = vrot.lane.b32.xlu0 %v923, 96
      %v927 = vpop.permute.xlu0 %926
      %vm928 = vcmask 64512
      %v930 = vsel %vm928, %v922, 0
      %v933 = vsel %vm928, %v923, 0
      %v936 = vsel %vm928, %v925, 0
      %v939 = vsel %vm928, %v927, 0
      %941 = vmatpush.bf16.xpose.msra.mxu0 0
      %942 = vmatpush.bf16.xpose.msra.mxu0 0
      %943 = vmatpush.bf16.xpose.msra.mxu0 0
      %944 = vmatpush.bf16.xpose.msra.mxu0 0
      %945 = vmatpush.bf16.xpose.msra.mxu0 0
      %946 = vmatpush.bf16.xpose.msra.mxu0 0
      %947 = vmatpush.bf16.xpose.msra.mxu0 %v939
      %948 = vmatpush.bf16.xpose.msra.mxu0 %v936
      %949 = vmatmul.bf16.gmra.mxu0 %v930
      %v950 = vpop.f32.mrf.mxu0
      %v951 = vadd.f32 %v914, %v950
      %v952 = vpop.f32.mrf.mxu0
      %v953 = vadd.f32 %v915, %v952
      %954 = vmatmul.bf16.gmra.mxu0 %v933
      %v955 = vpop.f32.mrf.mxu0
      %v956 = vadd.f32 %v916, %v955
      %v957 = vpop.f32.mrf.mxu0
      %v958 = vadd.f32 %v917, %v957
      %959 = vdwg.mxu0
      %v960 = vunpack.c.l.b16 %v891
      %v961 = vunpack.c.l.b16 %v893
      %v962 = vunpack.c.l.b16 %v895
      %v963 = vunpack.c.l.b16 %v897
      %v964 = vpack.c.b16 %v961, %v960
      %v965 = vpack.c.b16 %v963, %v962
      %966 = vrot.lane.b32.xlu0 %v964, 96
      %v967 = vpop.permute.xlu0 %966
      %968 = vrot.lane.b32.xlu0 %v965, 96
      %v969 = vpop.permute.xlu0 %968
      %v971 = vsel %vm928, %v964, 0
      %v974 = vsel %vm928, %v965, 0
      %v977 = vsel %vm928, %v967, 0
      %v980 = vsel %vm928, %v969, 0
      %982 = vmatpush.bf16.xpose.msra.mxu0 0
      %983 = vmatpush.bf16.xpose.msra.mxu0 0
      %984 = vmatpush.bf16.xpose.msra.mxu0 0
      %985 = vmatpush.bf16.xpose.msra.mxu0 0
      %986 = vmatpush.bf16.xpose.msra.mxu0 0
      %987 = vmatpush.bf16.xpose.msra.mxu0 0
      %988 = vmatpush.bf16.xpose.msra.mxu0 %v980
      %989 = vmatpush.bf16.xpose.msra.mxu0 %v977
      %990 = vmatmul.bf16.gmra.mxu0 %v971
      %v991 = vpop.f32.mrf.mxu0
      %v992 = vadd.f32 %v914, %v991
      %v993 = vpop.f32.mrf.mxu0
      %v994 = vadd.f32 %v915, %v993
      %995 = vmatmul.bf16.gmra.mxu0 %v974
      %v996 = vpop.f32.mrf.mxu0
      %v997 = vadd.f32 %v916, %v996
      %v998 = vpop.f32.mrf.mxu0
      %v999 = vadd.f32 %v917, %v998
      %1000 = vdwg.mxu0
      %v1001 = vunpack.c.l.b16 %v899
      %v1002 = vunpack.c.l.b16 %v901
      %v1003 = vunpack.c.l.b16 %v903
      %v1004 = vunpack.c.l.b16 %v905
      %v1005 = vpack.c.b16 %v1002, %v1001
      %v1006 = vpack.c.b16 %v1004, %v1003
      %1007 = vrot.lane.b32.xlu0 %v1005, 96
      %v1008 = vpop.permute.xlu0 %1007
      %1009 = vrot.lane.b32.xlu0 %v1006, 96
      %v1010 = vpop.permute.xlu0 %1009
      %v1012 = vsel %vm928, %v1005, 0
      %v1015 = vsel %vm928, %v1006, 0
      %v1018 = vsel %vm928, %v1008, 0
      %v1021 = vsel %vm928, %v1010, 0
      %1023 = vmatpush.bf16.xpose.msra.mxu0 0
      %1024 = vmatpush.bf16.xpose.msra.mxu0 0
      %1025 = vmatpush.bf16.xpose.msra.mxu0 0
      %1026 = vmatpush.bf16.xpose.msra.mxu0 0
      %1027 = vmatpush.bf16.xpose.msra.mxu0 0
      %1028 = vmatpush.bf16.xpose.msra.mxu0 0
      %1029 = vmatpush.bf16.xpose.msra.mxu0 %v1021
      %1030 = vmatpush.bf16.xpose.msra.mxu0 %v1018
      %1031 = vmatmul.bf16.gmra.mxu0 %v1012
      %v1032 = vpop.f32.mrf.mxu0
      %v1033 = vadd.f32 %v914, %v1032
      %v1034 = vpop.f32.mrf.mxu0
      %v1035 = vadd.f32 %v915, %v1034
      %1036 = vmatmul.bf16.gmra.mxu0 %v1015
      %v1037 = vpop.f32.mrf.mxu0
      %v1038 = vadd.f32 %v916, %v1037
      %v1039 = vpop.f32.mrf.mxu0
      %v1040 = vadd.f32 %v917, %v1039
      %1041 = vdwg.mxu0
      %v1042 = vunpack.c.l.b16 %v907
      %v1043 = vunpack.c.l.b16 %v909
      %v1044 = vunpack.c.l.b16 %v911
      %v1045 = vunpack.c.l.b16 %v913
      %v1046 = vpack.c.b16 %v1043, %v1042
      %v1047 = vpack.c.b16 %v1045, %v1044
      %1048 = vrot.lane.b32.xlu0 %v1046, 96
      %v1049 = vpop.permute.xlu0 %1048
      %1050 = vrot.lane.b32.xlu0 %v1047, 96
      %v1051 = vpop.permute.xlu0 %1050
      %v1053 = vsel %vm928, %v1046, 0
      %v1056 = vsel %vm928, %v1047, 0
      %v1059 = vsel %vm928, %v1049, 0
      %v1062 = vsel %vm928, %v1051, 0
      %1064 = vmatpush.bf16.xpose.msra.mxu0 0
      %1065 = vmatpush.bf16.xpose.msra.mxu0 0
      %1066 = vmatpush.bf16.xpose.msra.mxu0 0
      %1067 = vmatpush.bf16.xpose.msra.mxu0 0
      %1068 = vmatpush.bf16.xpose.msra.mxu0 0
      %1069 = vmatpush.bf16.xpose.msra.mxu0 0
      %1070 = vmatpush.bf16.xpose.msra.mxu0 %v1062
      %1071 = vmatpush.bf16.xpose.msra.mxu0 %v1059
      %1072 = vmatmul.bf16.gmra.mxu0 %v1053
      %v1073 = vpop.f32.mrf.mxu0
      %v1074 = vadd.f32 %v914, %v1073
      %v1075 = vpop.f32.mrf.mxu0
      %v1076 = vadd.f32 %v915, %v1075
      %1077 = vmatmul.bf16.gmra.mxu0 %v1056
      %v1078 = vpop.f32.mrf.mxu0
      %v1079 = vadd.f32 %v916, %v1078
      %v1080 = vpop.f32.mrf.mxu0
      %v1081 = vadd.f32 %v917, %v1080
      %1082 = vdwg.mxu0
      %v1083 = vsel %vm733, %v951, -inf
      %1084 = vmax.xlane.f32.xlu0 %v1083
      %v1085 = vpop.xlane.xlu0 %1084
      %v1086 = vsel %vm733, %v953, -inf
      %1087 = vmax.xlane.f32.xlu0 %v1086
      %v1088 = vpop.xlane.xlu0 %1087
      %v1089 = vsel %vm733, %v956, -inf
      %1090 = vmax.xlane.f32.xlu0 %v1089
      %v1091 = vpop.xlane.xlu0 %1090
      %v1092 = vsel %vm733, %v958, -inf
      %1093 = vmax.xlane.f32.xlu0 %v1092
      %v1094 = vpop.xlane.xlu0 %1093
      %v1095 = vsel %vm733, %v992, -inf
      %1096 = vmax.xlane.f32.xlu0 %v1095
      %v1097 = vpop.xlane.xlu0 %1096
      %v1098 = vsel %vm733, %v994, -inf
      %1099 = vmax.xlane.f32.xlu0 %v1098
      %v1100 = vpop.xlane.xlu0 %1099
      %v1101 = vsel %vm733, %v997, -inf
      %1102 = vmax.xlane.f32.xlu0 %v1101
      %v1103 = vpop.xlane.xlu0 %1102
      %v1104 = vsel %vm733, %v999, -inf
      %1105 = vmax.xlane.f32.xlu0 %v1104
      %v1106 = vpop.xlane.xlu0 %1105
      %v1107 = vsel %vm733, %v1033, -inf
      %1108 = vmax.xlane.f32.xlu0 %v1107
      %v1109 = vpop.xlane.xlu0 %1108
      %v1110 = vsel %vm733, %v1035, -inf
      %1111 = vmax.xlane.f32.xlu0 %v1110
      %v1112 = vpop.xlane.xlu0 %1111
      %v1113 = vsel %vm733, %v1038, -inf
      %1114 = vmax.xlane.f32.xlu0 %v1113
      %v1115 = vpop.xlane.xlu0 %1114
      %v1116 = vsel %vm733, %v1040, -inf
      %1117 = vmax.xlane.f32.xlu0 %v1116
      %v1118 = vpop.xlane.xlu0 %1117
      %v1119 = vsel %vm733, %v1074, -inf
      %1120 = vmax.xlane.f32.xlu0 %v1119
      %v1121 = vpop.xlane.xlu0 %1120
      %v1122 = vsel %vm733, %v1076, -inf
      %1123 = vmax.xlane.f32.xlu0 %v1122
      %v1124 = vpop.xlane.xlu0 %1123
      %v1125 = vsel %vm733, %v1079, -inf
      %1126 = vmax.xlane.f32.xlu0 %v1125
      %v1127 = vpop.xlane.xlu0 %1126
      %v1128 = vsel %vm733, %v1081, -inf
      %1129 = vmax.xlane.f32.xlu0 %v1128
      %v1130 = vpop.xlane.xlu0 %1129
      %v1131 = vsub.f32 %v951, %v1085
      %v1132 = vsub.f32 %v953, %v1088
      %v1133 = vsub.f32 %v956, %v1091
      %v1134 = vsub.f32 %v958, %v1094
      %v1135 = vsub.f32 %v992, %v1097
      %v1136 = vsub.f32 %v994, %v1100
      %v1137 = vsub.f32 %v997, %v1103
      %v1138 = vsub.f32 %v999, %v1106
      %v1139 = vsub.f32 %v1033, %v1109
      %v1140 = vsub.f32 %v1035, %v1112
      %v1141 = vsub.f32 %v1038, %v1115
      %v1142 = vsub.f32 %v1040, %v1118
      %v1143 = vsub.f32 %v1074, %v1121
      %v1144 = vsub.f32 %v1076, %v1124
      %v1145 = vsub.f32 %v1079, %v1127
      %v1146 = vsub.f32 %v1081, %v1130
      %v1147 = vmul.f32 %v1131, 1.442695
      %v1148 = vpow.pop %v1147
      %v1149 = vmul.f32 %v1132, 1.442695
      %v1150 = vpow.pop %v1149
      %v1151 = vmul.f32 %v1133, 1.442695
      %v1152 = vpow.pop %v1151
      %v1153 = vmul.f32 %v1134, 1.442695
      %v1154 = vpow.pop %v1153
      %v1155 = vmul.f32 %v1135, 1.442695
      %v1156 = vpow.pop %v1155
      %v1157 = vmul.f32 %v1136, 1.442695
      %v1158 = vpow.pop %v1157
      %v1159 = vmul.f32 %v1137, 1.442695
      %v1160 = vpow.pop %v1159
      %v1161 = vmul.f32 %v1138, 1.442695
      %v1162 = vpow.pop %v1161
      %v1163 = vmul.f32 %v1139, 1.442695
      %v1164 = vpow.pop %v1163
      %v1165 = vmul.f32 %v1140, 1.442695
      %v1166 = vpow.pop %v1165
      %v1167 = vmul.f32 %v1141, 1.442695
      %v1168 = vpow.pop %v1167
      %v1169 = vmul.f32 %v1142, 1.442695
      %v1170 = vpow.pop %v1169
      %v1171 = vmul.f32 %v1143, 1.442695
      %v1172 = vpow.pop %v1171
      %v1173 = vmul.f32 %v1144, 1.442695
      %v1174 = vpow.pop %v1173
      %v1175 = vmul.f32 %v1145, 1.442695
      %v1176 = vpow.pop %v1175
      %v1177 = vmul.f32 %v1146, 1.442695
      %v1178 = vpow.pop %v1177
      %v1179 = vsel %vm733, %v1148, 0.0
      %1180 = vadd.xlane.f32.xlu0 %v1179
      %v1181 = vpop.xlane.xlu0 %1180
      %v1182 = vsel %vm733, %v1150, 0.0
      %1183 = vadd.xlane.f32.xlu0 %v1182
      %v1184 = vpop.xlane.xlu0 %1183
      %v1185 = vsel %vm733, %v1152, 0.0
      %1186 = vadd.xlane.f32.xlu0 %v1185
      %v1187 = vpop.xlane.xlu0 %1186
      %v1188 = vsel %vm733, %v1154, 0.0
      %1189 = vadd.xlane.f32.xlu0 %v1188
      %v1190 = vpop.xlane.xlu0 %1189
      %v1191 = vsel %vm733, %v1156, 0.0
      %1192 = vadd.xlane.f32.xlu0 %v1191
      %v1193 = vpop.xlane.xlu0 %1192
      %v1194 = vsel %vm733, %v1158, 0.0
      %1195 = vadd.xlane.f32.xlu0 %v1194
      %v1196 = vpop.xlane.xlu0 %1195
      %v1197 = vsel %vm733, %v1160, 0.0
      %1198 = vadd.xlane.f32.xlu0 %v1197
      %v1199 = vpop.xlane.xlu0 %1198
      %v1200 = vsel %vm733, %v1162, 0.0
      %1201 = vadd.xlane.f32.xlu0 %v1200
      %v1202 = vpop.xlane.xlu0 %1201
      %v1203 = vsel %vm733, %v1164, 0.0
      %1204 = vadd.xlane.f32.xlu0 %v1203
      %v1205 = vpop.xlane.xlu0 %1204
      %v1206 = vsel %vm733, %v1166, 0.0
      %1207 = vadd.xlane.f32.xlu0 %v1206
      %v1208 = vpop.xlane.xlu0 %1207
      %v1209 = vsel %vm733, %v1168, 0.0
      %1210 = vadd.xlane.f32.xlu0 %v1209
      %v1211 = vpop.xlane.xlu0 %1210
      %v1212 = vsel %vm733, %v1170, 0.0
      %1213 = vadd.xlane.f32.xlu0 %v1212
      %v1214 = vpop.xlane.xlu0 %1213
      %v1215 = vsel %vm733, %v1172, 0.0
      %1216 = vadd.xlane.f32.xlu0 %v1215
      %v1217 = vpop.xlane.xlu0 %1216
      %v1218 = vsel %vm733, %v1174, 0.0
      %1219 = vadd.xlane.f32.xlu0 %v1218
      %v1220 = vpop.xlane.xlu0 %1219
      %v1221 = vsel %vm733, %v1176, 0.0
      %1222 = vadd.xlane.f32.xlu0 %v1221
      %v1223 = vpop.xlane.xlu0 %1222
      %v1224 = vsel %vm733, %v1178, 0.0
      %1225 = vadd.xlane.f32.xlu0 %v1224
      %v1226 = vpop.xlane.xlu0 %1225
      %v1227 = vrcp.pop %v1181
      %v1228 = vrcp.pop %v1184
      %v1229 = vrcp.pop %v1187
      %v1230 = vrcp.pop %v1190
      %v1231 = vrcp.pop %v1193
      %v1232 = vrcp.pop %v1196
      %v1233 = vrcp.pop %v1199
      %v1234 = vrcp.pop %v1202
      %v1235 = vrcp.pop %v1205
      %v1236 = vrcp.pop %v1208
      %v1237 = vrcp.pop %v1211
      %v1238 = vrcp.pop %v1214
      %v1239 = vrcp.pop %v1217
      %v1240 = vrcp.pop %v1220
      %v1241 = vrcp.pop %v1223
      %v1242 = vrcp.pop %v1226
      %v1243 = vmul.f32 %v1148, %v1227
      %v1244 = vmul.f32 %v1150, %v1228
      %v1245 = vmul.f32 %v1152, %v1229
      %v1246 = vmul.f32 %v1154, %v1230
      %v1247 = vmul.f32 %v1156, %v1231
      %v1248 = vmul.f32 %v1158, %v1232
      %v1249 = vmul.f32 %v1160, %v1233
      %v1250 = vmul.f32 %v1162, %v1234
      %v1251 = vmul.f32 %v1164, %v1235
      %v1252 = vmul.f32 %v1166, %v1236
      %v1253 = vmul.f32 %v1168, %v1237
      %v1254 = vmul.f32 %v1170, %v1238
      %v1255 = vmul.f32 %v1172, %v1239
      %v1256 = vmul.f32 %v1174, %v1240
      %v1257 = vmul.f32 %v1176, %v1241
      %v1258 = vmul.f32 %v1178, %v1242
      %v1259 = vpack.c.bf16 %v1243, %v1243
      %v1260 = vpack.c.bf16 %v1244, %v1244
      %v1261 = vpack.c.bf16 %v1245, %v1245
      %v1262 = vpack.c.bf16 %v1246, %v1246
      %v1263 = vpack.c.bf16 %v1247, %v1247
      %v1264 = vpack.c.bf16 %v1248, %v1248
      %v1265 = vpack.c.bf16 %v1249, %v1249
      %v1266 = vpack.c.bf16 %v1250, %v1250
      %v1267 = vpack.c.bf16 %v1251, %v1251
      %v1268 = vpack.c.bf16 %v1252, %v1252
      %v1269 = vpack.c.bf16 %v1253, %v1253
      %v1270 = vpack.c.bf16 %v1254, %v1254
      %v1271 = vpack.c.bf16 %v1255, %v1255
      %v1272 = vpack.c.bf16 %v1256, %v1256
      %v1273 = vpack.c.bf16 %v1257, %v1257
      %v1274 = vpack.c.bf16 %v1258, %v1258
      %v1279 = vunpack.c.l.b16 %v1259
      %v1280 = vunpack.c.l.b16 %v1260
      %v1281 = vunpack.c.l.b16 %v1261
      %v1282 = vunpack.c.l.b16 %v1262
      %v1283 = vpack.c.b16 %v1280, %v1279
      %v1284 = vpack.c.b16 %v1282, %v1281
      %1285 = vrot.lane.b32.xlu0 %v922, 64
      %v1286 = vpop.permute.xlu0 %1285
      %1287 = vrot.lane.b32.xlu0 %v923, 64
      %v1288 = vpop.permute.xlu0 %1287
      %v1292 = vsel %vm733, %v1283, 0
      %v1295 = vsel %vm733, %v1284, 0
      %1297 = vmatpush.bf16.msra.mxu0 0
      %1298 = vmatpush.bf16.msra.mxu0 0
      %1299 = vmatpush.bf16.msra.mxu0 0
      %1300 = vmatpush.bf16.msra.mxu0 0
      %1301 = vmatpush.bf16.msra.mxu0 0
      %1302 = vmatpush.bf16.msra.mxu0 0
      %1303 = vmatpush.bf16.msra.mxu0 %v1288
      %1304 = vmatpush.bf16.msra.mxu0 %v1286
      %1305 = vmatmul.bf16.gmra.mxu0 %v1292
      %v1306 = vpop.f32.mrf.mxu0
      %v1307 = vadd.f32 0.0, %v1306
      %v1308 = vpop.f32.mrf.mxu0
      %v1309 = vadd.f32 0.0, %v1308
      %1310 = vmatmul.bf16.gmra.mxu0 %v1295
      %v1311 = vpop.f32.mrf.mxu0
      %v1312 = vadd.f32 0.0, %v1311
      %v1313 = vpop.f32.mrf.mxu0
      %v1314 = vadd.f32 0.0, %v1313
      %1315 = vdwg.mxu0
      %v1320 = vunpack.c.l.b16 %v1263
      %v1321 = vunpack.c.l.b16 %v1264
      %v1322 = vunpack.c.l.b16 %v1265
      %v1323 = vunpack.c.l.b16 %v1266
      %v1324 = vpack.c.b16 %v1321, %v1320
      %v1325 = vpack.c.b16 %v1323, %v1322
      %1326 = vrot.lane.b32.xlu0 %v964, 64
      %v1327 = vpop.permute.xlu0 %1326
      %1328 = vrot.lane.b32.xlu0 %v965, 64
      %v1329 = vpop.permute.xlu0 %1328
      %v1333 = vsel %vm733, %v1324, 0
      %v1336 = vsel %vm733, %v1325, 0
      %1338 = vmatpush.bf16.msra.mxu0 0
      %1339 = vmatpush.bf16.msra.mxu0 0
      %1340 = vmatpush.bf16.msra.mxu0 0
      %1341 = vmatpush.bf16.msra.mxu0 0
      %1342 = vmatpush.bf16.msra.mxu0 0
      %1343 = vmatpush.bf16.msra.mxu0 0
      %1344 = vmatpush.bf16.msra.mxu0 %v1329
      %1345 = vmatpush.bf16.msra.mxu0 %v1327
      %1346 = vmatmul.bf16.gmra.mxu0 %v1333
      %v1347 = vpop.f32.mrf.mxu0
      %v1348 = vadd.f32 0.0, %v1347
      %v1349 = vpop.f32.mrf.mxu0
      %v1350 = vadd.f32 0.0, %v1349
      %1351 = vmatmul.bf16.gmra.mxu0 %v1336
      %v1352 = vpop.f32.mrf.mxu0
      %v1353 = vadd.f32 0.0, %v1352
      %v1354 = vpop.f32.mrf.mxu0
      %v1355 = vadd.f32 0.0, %v1354
      %1356 = vdwg.mxu0
      %v1361 = vunpack.c.l.b16 %v1267
      %v1362 = vunpack.c.l.b16 %v1268
      %v1363 = vunpack.c.l.b16 %v1269
      %v1364 = vunpack.c.l.b16 %v1270
      %v1365 = vpack.c.b16 %v1362, %v1361
      %v1366 = vpack.c.b16 %v1364, %v1363
      %1367 = vrot.lane.b32.xlu0 %v1005, 64
      %v1368 = vpop.permute.xlu0 %1367
      %1369 = vrot.lane.b32.xlu0 %v1006, 64
      %v1370 = vpop.permute.xlu0 %1369
      %v1374 = vsel %vm733, %v1365, 0
      %v1377 = vsel %vm733, %v1366, 0
      %1379 = vmatpush.bf16.msra.mxu0 0
      %1380 = vmatpush.bf16.msra.mxu0 0
      %1381 = vmatpush.bf16.msra.mxu0 0
      %1382 = vmatpush.bf16.msra.mxu0 0
      %1383 = vmatpush.bf16.msra.mxu0 0
      %1384 = vmatpush.bf16.msra.mxu0 0
      %1385 = vmatpush.bf16.msra.mxu0 %v1370
      %1386 = vmatpush.bf16.msra.mxu0 %v1368
      %1387 = vmatmul.bf16.gmra.mxu0 %v1374
      %v1388 = vpop.f32.mrf.mxu0
      %v1389 = vadd.f32 0.0, %v1388
      %v1390 = vpop.f32.mrf.mxu0
      %v1391 = vadd.f32 0.0, %v1390
      %1392 = vmatmul.bf16.gmra.mxu0 %v1377
      %v1393 = vpop.f32.mrf.mxu0
      %v1394 = vadd.f32 0.0, %v1393
      %v1395 = vpop.f32.mrf.mxu0
      %v1396 = vadd.f32 0.0, %v1395
      %1397 = vdwg.mxu0
      %v1402 = vunpack.c.l.b16 %v1271
      %v1403 = vunpack.c.l.b16 %v1272
      %v1404 = vunpack.c.l.b16 %v1273
      %v1405 = vunpack.c.l.b16 %v1274
      %v1406 = vpack.c.b16 %v1403, %v1402
      %v1407 = vpack.c.b16 %v1405, %v1404
      %1408 = vrot.lane.b32.xlu0 %v1046, 64
      %v1409 = vpop.permute.xlu0 %1408
      %1410 = vrot.lane.b32.xlu0 %v1047, 64
      %v1411 = vpop.permute.xlu0 %1410
      %v1415 = vsel %vm733, %v1406, 0
      %v1418 = vsel %vm733, %v1407, 0
      %1420 = vmatpush.bf16.msra.mxu0 0
      %1421 = vmatpush.bf16.msra.mxu0 0
      %1422 = vmatpush.bf16.msra.mxu0 0
      %1423 = vmatpush.bf16.msra.mxu0 0
      %1424 = vmatpush.bf16.msra.mxu0 0
      %1425 = vmatpush.bf16.msra.mxu0 0
      %1426 = vmatpush.bf16.msra.mxu0 %v1411
      %1427 = vmatpush.bf16.msra.mxu0 %v1409
      %1428 = vmatmul.bf16.gmra.mxu0 %v1415
      %v1429 = vpop.f32.mrf.mxu0
      %v1430 = vadd.f32 0.0, %v1429
      %v1431 = vpop.f32.mrf.mxu0
      %v1432 = vadd.f32 0.0, %v1431
      %1433 = vmatmul.bf16.gmra.mxu0 %v1418
      %v1434 = vpop.f32.mrf.mxu0
      %v1435 = vadd.f32 0.0, %v1434
      %v1436 = vpop.f32.mrf.mxu0
      %v1437 = vadd.f32 0.0, %v1436
      %1438 = vdwg.mxu0
      %1443 = vrot.lane.b32.xlu0 %v1348, 8
      %v1444 = vpop.permute.xlu0 %1443
      %1445 = vrot.lane.b32.xlu0 %v1350, 8
      %v1446 = vpop.permute.xlu0 %1445
      %1447 = vrot.lane.b32.xlu0 %v1353, 8
      %v1448 = vpop.permute.xlu0 %1447
      %1449 = vrot.lane.b32.xlu0 %v1355, 8
      %v1450 = vpop.permute.xlu0 %1449
      %1459 = vrot.lane.b32.xlu0 %v1389, 16
      %v1460 = vpop.permute.xlu0 %1459
      %1461 = vrot.lane.b32.xlu0 %v1391, 16
      %v1462 = vpop.permute.xlu0 %1461
      %1463 = vrot.lane.b32.xlu0 %v1394, 16
      %v1464 = vpop.permute.xlu0 %1463
      %1465 = vrot.lane.b32.xlu0 %v1396, 16
      %v1466 = vpop.permute.xlu0 %1465
      %1475 = vrot.lane.b32.xlu0 %v1430, 24
      %v1476 = vpop.permute.xlu0 %1475
      %1477 = vrot.lane.b32.xlu0 %v1432, 24
      %v1478 = vpop.permute.xlu0 %1477
      %1479 = vrot.lane.b32.xlu0 %v1435, 24
      %v1480 = vpop.permute.xlu0 %1479
      %1481 = vrot.lane.b32.xlu0 %v1437, 24
      %v1482 = vpop.permute.xlu0 %1481
      %v1487 = vsel %vm928, %v1307, %v1444
      %v1488 = vsel %vm928, %v1309, %v1446
      %v1489 = vsel %vm928, %v1312, %v1448
      %v1490 = vsel %vm928, %v1314, %v1450
      %vm1491 = vcmask 130048
      %v1492 = vsel %vm1491, %v1487, %v1460
      %v1493 = vsel %vm1491, %v1488, %v1462
      %v1494 = vsel %vm1491, %v1489, %v1464
      %v1495 = vsel %vm1491, %v1490, %v1466
      %vm1496 = vcmask 195584
      %v1497 = vsel %vm1496, %v1492, %v1476
      %v1498 = vsel %vm1496, %v1493, %v1478
      %v1499 = vsel %vm1496, %v1494, %v1480
      %v1500 = vsel %vm1496, %v1495, %v1482
      %v1501 = vpack.c.bf16 %v1498, %v1497
      %v1502 = vpack.c.bf16 %v1500, %v1499
      %v1503 = vld [vmem:[%s613] sm:$0xf]
      %v1504 = vld [vmem:[%s613 + $0x4] sm:$0xf]
      %v1505 = vld [vmem:[%s613 + $0x8] sm:$0xf]
      %v1506 = vld [vmem:[%s613 + $0xc] sm:$0xf]
      %v1511 = vunpack.c.l.b16 %v1503
      %v1512 = vunpack.c.l.b16 %v1504
      %v1513 = vunpack.c.l.b16 %v1505
      %v1514 = vunpack.c.l.b16 %v1506
      %v1515 = vpack.c.b16 %v1512, %v1511
      %v1516 = vpack.c.b16 %v1514, %v1513
      %v1520 = vsel %vm733, %v1501, 0
      %v1523 = vsel %vm733, %v1502, 0
      %1525 = vmatpush.bf16.msra.mxu0 0
      %1526 = vmatpush.bf16.msra.mxu0 0
      %1527 = vmatpush.bf16.msra.mxu0 0
      %1528 = vmatpush.bf16.msra.mxu0 0
      %1529 = vmatpush.bf16.msra.mxu0 0
      %1530 = vmatpush.bf16.msra.mxu0 0
      %1531 = vmatpush.bf16.msra.mxu0 %v1516
      %1532 = vmatpush.bf16.msra.mxu0 %v1515
      %1533 = vmatmul.bf16.gmra.mxu0 %v1520
      %v1534 = vpop.f32.mrf.mxu0
      %v1535 = vadd.f32 0.0, %v1534
      %v1536 = vpop.f32.mrf.mxu0
      %v1537 = vadd.f32 0.0, %v1536
      %1538 = vmatmul.bf16.gmra.mxu0 %v1523
      %v1539 = vpop.f32.mrf.mxu0
      %v1540 = vadd.f32 0.0, %v1539
      %v1541 = vpop.f32.mrf.mxu0
      %v1542 = vadd.f32 0.0, %v1541
      %1543 = vdwg.mxu0
      %v1544 = vadd.f32 %v728, %v1535
      %v1545 = vadd.f32 %v729, %v1537
      %v1546 = vadd.f32 %v730, %v1540
      %v1547 = vadd.f32 %v731, %v1542
      %v1548 = vperm.slane %v732, 2
      %v1549 = vadd.f32 %v1544, %v1548
      %v1550 = vadd.f32 %v1545, %v1548
      %v1551 = vadd.f32 %v1546, %v1548
      %v1552 = vadd.f32 %v1547, %v1548
      %v1553 = vsel %vm733, %v1549, 0.0
      %1554 = vadd.xlane.f32.xlu0 %v1553
      %v1555 = vpop.xlane.xlu0 %1554
      %v1556 = vsel %vm733, %v1550, 0.0
      %1557 = vadd.xlane.f32.xlu0 %v1556
      %v1558 = vpop.xlane.xlu0 %1557
      %v1559 = vsel %vm733, %v1551, 0.0
      %1560 = vadd.xlane.f32.xlu0 %v1559
      %v1561 = vpop.xlane.xlu0 %1560
      %v1562 = vsel %vm733, %v1552, 0.0
      %1563 = vadd.xlane.f32.xlu0 %v1562
      %v1564 = vpop.xlane.xlu0 %1563
      %v1565 = vmul.f32 %v1555, %v752
      %v1566 = vmul.f32 %v1558, %v752
      %v1567 = vmul.f32 %v1561, %v752
      %v1568 = vmul.f32 %v1564, %v752
      %v1569 = vsub.f32 %v1549, %v1565
      %v1570 = vsub.f32 %v1550, %v1566
      %v1571 = vsub.f32 %v1551, %v1567
      %v1572 = vsub.f32 %v1552, %v1568
      %v1573 = vmul.f32 %v1569, %v1569
      %v1574 = vmul.f32 %v1570, %v1570
      %v1575 = vmul.f32 %v1571, %v1571
      %v1576 = vmul.f32 %v1572, %v1572
      %v1577 = vsel %vm733, %v1573, 0.0
      %1578 = vadd.xlane.f32.xlu0 %v1577
      %v1579 = vpop.xlane.xlu0 %1578
      %v1580 = vsel %vm733, %v1574, 0.0
      %1581 = vadd.xlane.f32.xlu0 %v1580
      %v1582 = vpop.xlane.xlu0 %1581
      %v1583 = vsel %vm733, %v1575, 0.0
      %1584 = vadd.xlane.f32.xlu0 %v1583
      %v1585 = vpop.xlane.xlu0 %1584
      %v1586 = vsel %vm733, %v1576, 0.0
      %1587 = vadd.xlane.f32.xlu0 %v1586
      %v1588 = vpop.xlane.xlu0 %1587
      %v1589 = vmul.f32 %v1579, %v752
      %v1590 = vmul.f32 %v1582, %v752
      %v1591 = vmul.f32 %v1585, %v752
      %v1592 = vmul.f32 %v1588, %v752
      %v1593 = vadd.f32 %v1589, 1e-05
      %v1594 = vadd.f32 %v1590, 1e-05
      %v1595 = vadd.f32 %v1591, 1e-05
      %v1596 = vadd.f32 %v1592, 1e-05
      %v1597 = vrsqrt.pop %v1593
      %v1598 = vmul.f32 %v1597, %v1593
      %v1599 = vmul.f32 %v1598, %v1597
      %v1600 = vmul.f32 0.5, %v1599
      %v1601 = vsub.f32 1.5, %v1600
      %v1602 = vmul.f32 %v1597, %v1601
      %vm1603 = vweird.f32 %v1593
      %vm1604 = vweird.f32 %v1597
      %vm1605 = vmor %vm1603, %vm1604
      %v1606 = vsel %vm1605, %v1597, %v1602
      %v1607 = vrsqrt.pop %v1594
      %v1608 = vmul.f32 %v1607, %v1594
      %v1609 = vmul.f32 %v1608, %v1607
      %v1610 = vmul.f32 0.5, %v1609
      %v1611 = vsub.f32 1.5, %v1610
      %v1612 = vmul.f32 %v1607, %v1611
      %vm1613 = vweird.f32 %v1594
      %vm1614 = vweird.f32 %v1607
      %vm1615 = vmor %vm1613, %vm1614
      %v1616 = vsel %vm1615, %v1607, %v1612
      %v1617 = vrsqrt.pop %v1595
      %v1618 = vmul.f32 %v1617, %v1595
      %v1619 = vmul.f32 %v1618, %v1617
      %v1620 = vmul.f32 0.5, %v1619
      %v1621 = vsub.f32 1.5, %v1620
      %v1622 = vmul.f32 %v1617, %v1621
      %vm1623 = vweird.f32 %v1595
      %vm1624 = vweird.f32 %v1617
      %vm1625 = vmor %vm1623, %vm1624
      %v1626 = vsel %vm1625, %v1617, %v1622
      %v1627 = vrsqrt.pop %v1596
      %v1628 = vmul.f32 %v1627, %v1596
      %v1629 = vmul.f32 %v1628, %v1627
      %v1630 = vmul.f32 0.5, %v1629
      %v1631 = vsub.f32 1.5, %v1630
      %v1632 = vmul.f32 %v1627, %v1631
      %vm1633 = vweird.f32 %v1596
      %vm1634 = vweird.f32 %v1627
      %vm1635 = vmor %vm1633, %vm1634
      %v1636 = vsel %vm1635, %v1627, %v1632
      %v1637 = vmul.f32 %v1569, %v1606
      %v1638 = vmul.f32 %v1570, %v1616
      %v1639 = vmul.f32 %v1571, %v1626
      %v1640 = vmul.f32 %v1572, %v1636
      %v1641 = vperm.slane %v732, 3
      %v1642 = vmul.f32 %v1637, %v1641
      %v1643 = vmul.f32 %v1638, %v1641
      %v1644 = vmul.f32 %v1639, %v1641
      %v1645 = vmul.f32 %v1640, %v1641
      %v1646 = vperm.slane %v732, 4
      %v1647 = vadd.f32 %v1642, %v1646
      %v1648 = vadd.f32 %v1643, %v1646
      %v1649 = vadd.f32 %v1644, %v1646
      %v1650 = vadd.f32 %v1645, %v1646
      %v1651 = vpack.c.bf16 %v1648, %v1647
      %v1652 = vpack.c.bf16 %v1650, %v1649
      %v1653 = vld [vmem:[%s618] sm:$0xf]
      %v1654 = vld [vmem:[%s618 + $0x4] sm:$0xf]
      %v1655 = vld [vmem:[%s618 + $0x8] sm:$0xf]
      %v1656 = vld [vmem:[%s618 + $0xc] sm:$0xf]
      %v1657 = vperm.slane %v732, 6
      %v1662 = vunpack.c.l.b16 %v1653
      %v1663 = vunpack.c.l.b16 %v1654
      %v1664 = vunpack.c.l.b16 %v1655
      %v1665 = vunpack.c.l.b16 %v1656
      %v1666 = vpack.c.b16 %v1663, %v1662
      %v1667 = vpack.c.b16 %v1665, %v1664
      %v1671 = vsel %vm733, %v1651, 0
      %v1674 = vsel %vm733, %v1652, 0
      %1676 = vmatpush.bf16.msra.mxu0 0
      %1677 = vmatpush.bf16.msra.mxu0 0
      %1678 = vmatpush.bf16.msra.mxu0 0
      %1679 = vmatpush.bf16.msra.mxu0 0
      %1680 = vmatpush.bf16.msra.mxu0 0
      %1681 = vmatpush.bf16.msra.mxu0 0
      %1682 = vmatpush.bf16.msra.mxu0 %v1667
      %1683 = vmatpush.bf16.msra.mxu0 %v1666
      %1684 = vmatmul.bf16.gmra.mxu0 %v1671
      %v1685 = vpop.f32.mrf.mxu0
      %v1686 = vadd.f32 %v1657, %v1685
      %v1687 = vpop.f32.mrf.mxu0
      %v1688 = vadd.f32 %v1657, %v1687
      %1689 = vmatmul.bf16.gmra.mxu0 %v1674
      %v1690 = vpop.f32.mrf.mxu0
      %v1691 = vadd.f32 %v1657, %v1690
      %v1692 = vpop.f32.mrf.mxu0
      %v1693 = vadd.f32 %v1657, %v1692
      %1694 = vdwg.mxu0
      %v1695 = vmul.f32 %v1686, 0.5
      %v1696 = vmul.f32 %v1688, 0.5
      %v1697 = vmul.f32 %v1691, 0.5
      %v1698 = vmul.f32 %v1693, 0.5
      %v1699 = vmul.f32 %v1686, 0.70710677
      %v1700 = vmul.f32 %v1688, 0.70710677
      %v1701 = vmul.f32 %v1691, 0.70710677
      %v1702 = vmul.f32 %v1693, 0.70710677
      %vm1703 = vcmp.ge.f32.partialorder %v1699, 0.0
      %vm1704 = vcmp.ge.f32.partialorder %v1700, 0.0
      %vm1705 = vcmp.ge.f32.partialorder %v1701, 0.0
      %vm1706 = vcmp.ge.f32.partialorder %v1702, 0.0
      %v1707 = vsel %vm1703, 1.0, -1.0
      %v1708 = vsel %vm1704, 1.0, -1.0
      %v1709 = vsel %vm1705, 1.0, -1.0
      %v1710 = vsel %vm1706, 1.0, -1.0
      %v1711 = vand.u32 2147483647, %v1699
      %v1712 = vand.u32 2147483647, %v1700
      %v1713 = vand.u32 2147483647, %v1701
      %v1714 = vand.u32 2147483647, %v1702
      %v1715 = vmul.f32 %v1711, 0.3275911
      %v1716 = vmul.f32 %v1712, 0.3275911
      %v1717 = vmul.f32 %v1713, 0.3275911
      %v1718 = vmul.f32 %v1714, 0.3275911
      %v1719 = vadd.f32 %v1715, 1.0
      %v1720 = vadd.f32 %v1716, 1.0
      %v1721 = vadd.f32 %v1717, 1.0
      %v1722 = vadd.f32 %v1718, 1.0
      %v1723 = vrcp.pop %v1719
      %v1724 = vmul.f32 %v1719, %v1723
      %v1725 = vsub.f32 1.0, %v1724
      %v1726 = vmul.f32 %v1723, %v1725
      %v1727 = vadd.f32 %v1723, %v1726
      %vm1728 = vweird.f32 %v1719
      %vm1729 = vweird.f32 %v1723
      %vm1730 = vmor %vm1728, %vm1729
      %v1731 = vsel %vm1730, %v1723, %v1727
      %v1732 = vand.u32 2147483647, %v1719
      %vm1733 = vcmp.eq.f32.partialorder %v1732, 8.507059e+37
      %v1734 = vand.u32 %v1719, 2147483648
      %v1735 = vor.u32 1.1754944e-38, %v1734
      %v1736 = vsel %vm1733, %v1735, %v1731
      %v1737 = vmul.f32 1.0, %v1736
      %v1738 = vrcp.pop %v1720
      %v1739 = vmul.f32 %v1720, %v1738
      %v1740 = vsub.f32 1.0, %v1739
      %v1741 = vmul.f32 %v1738, %v1740
      %v1742 = vadd.f32 %v1738, %v1741
      %vm1743 = vweird.f32 %v1720
      %vm1744 = vweird.f32 %v1738
      %vm1745 = vmor %vm1743, %vm1744
      %v1746 = vsel %vm1745, %v1738, %v1742
      %v1747 = vand.u32 2147483647, %v1720
      %vm1748 = vcmp.eq.f32.partialorder %v1747, 8.507059e+37
      %v1749 = vand.u32 %v1720, 2147483648
      %v1750 = vor.u32 1.1754944e-38, %v1749
      %v1751 = vsel %vm1748, %v1750, %v1746
      %v1752 = vmul.f32 1.0, %v1751
      %v1753 = vrcp.pop %v1721
      %v1754 = vmul.f32 %v1721, %v1753
      %v1755 = vsub.f32 1.0, %v1754
      %v1756 = vmul.f32 %v1753, %v1755
      %v1757 = vadd.f32 %v1753, %v1756
      %vm1758 = vweird.f32 %v1721
      %vm1759 = vweird.f32 %v1753
      %vm1760 = vmor %vm1758, %vm1759
      %v1761 = vsel %vm1760, %v1753, %v1757
      %v1762 = vand.u32 2147483647, %v1721
      %vm1763 = vcmp.eq.f32.partialorder %v1762, 8.507059e+37
      %v1764 = vand.u32 %v1721, 2147483648
      %v1765 = vor.u32 1.1754944e-38, %v1764
      %v1766 = vsel %vm1763, %v1765, %v1761
      %v1767 = vmul.f32 1.0, %v1766
      %v1768 = vrcp.pop %v1722
      %v1769 = vmul.f32 %v1722, %v1768
      %v1770 = vsub.f32 1.0, %v1769
      %v1771 = vmul.f32 %v1768, %v1770
      %v1772 = vadd.f32 %v1768, %v1771
      %vm1773 = vweird.f32 %v1722
      %vm1774 = vweird.f32 %v1768
      %vm1775 = vmor %vm1773, %vm1774
      %v1776 = vsel %vm1775, %v1768, %v1772
      %v1777 = vand.u32 2147483647, %v1722
      %vm1778 = vcmp.eq.f32.partialorder %v1777, 8.507059e+37
      %v1779 = vand.u32 %v1722, 2147483648
      %v1780 = vor.u32 1.1754944e-38, %v1779
      %v1781 = vsel %vm1778, %v1780, %v1776
      %v1782 = vmul.f32 1.0, %v1781
      %v1783 = vmul.f32 %v1737, 1.0614054
      %v1784 = vmul.f32 %v1752, 1.0614054
      %v1785 = vmul.f32 %v1767, 1.0614054
      %v1786 = vmul.f32 %v1782, 1.0614054
      %v1787 = vadd.f32 %v1783, -1.4531521
      %v1788 = vadd.f32 %v1784, -1.4531521
      %v1789 = vadd.f32 %v1785, -1.4531521
      %v1790 = vadd.f32 %v1786, -1.4531521
      %v1791 = vmul.f32 %v1787, %v1737
      %v1792 = vmul.f32 %v1788, %v1752
      %v1793 = vmul.f32 %v1789, %v1767
      %v1794 = vmul.f32 %v1790, %v1782
      %v1795 = vadd.f32 %v1791, 1.4214138
      %v1796 = vadd.f32 %v1792, 1.4214138
      %v1797 = vadd.f32 %v1793, 1.4214138
      %v1798 = vadd.f32 %v1794, 1.4214138
      %v1799 = vmul.f32 %v1795, %v1737
      %v1800 = vmul.f32 %v1796, %v1752
      %v1801 = vmul.f32 %v1797, %v1767
      %v1802 = vmul.f32 %v1798, %v1782
      %v1803 = vadd.f32 %v1799, -0.28449672
      %v1804 = vadd.f32 %v1800, -0.28449672
      %v1805 = vadd.f32 %v1801, -0.28449672
      %v1806 = vadd.f32 %v1802, -0.28449672
      %v1807 = vmul.f32 %v1803, %v1737
      %v1808 = vmul.f32 %v1804, %v1752
      %v1809 = vmul.f32 %v1805, %v1767
      %v1810 = vmul.f32 %v1806, %v1782
      %v1811 = vadd.f32 %v1807, 0.2548296
      %v1812 = vadd.f32 %v1808, 0.2548296
      %v1813 = vadd.f32 %v1809, 0.2548296
      %v1814 = vadd.f32 %v1810, 0.2548296
      %v1815 = vmul.f32 %v1811, %v1737
      %v1816 = vmul.f32 %v1812, %v1752
      %v1817 = vmul.f32 %v1813, %v1767
      %v1818 = vmul.f32 %v1814, %v1782
      %v1819 = vsub.f32 0.0, %v1711
      %v1820 = vsub.f32 0.0, %v1712
      %v1821 = vsub.f32 0.0, %v1713
      %v1822 = vsub.f32 0.0, %v1714
      %v1823 = vmul.f32 %v1819, %v1711
      %v1824 = vmul.f32 %v1820, %v1712
      %v1825 = vmul.f32 %v1821, %v1713
      %v1826 = vmul.f32 %v1822, %v1714
      %v1827 = vmul.f32 %v1823, 1.442695
      %v1828 = vpow.pop %v1827
      %v1829 = vmul.f32 %v1824, 1.442695
      %v1830 = vpow.pop %v1829
      %v1831 = vmul.f32 %v1825, 1.442695
      %v1832 = vpow.pop %v1831
      %v1833 = vmul.f32 %v1826, 1.442695
      %v1834 = vpow.pop %v1833
      %v1835 = vmul.f32 %v1815, %v1828
      %v1836 = vmul.f32 %v1816, %v1830
      %v1837 = vmul.f32 %v1817, %v1832
      %v1838 = vmul.f32 %v1818, %v1834
      %v1839 = vsub.f32 1.0, %v1835
      %v1840 = vsub.f32 1.0, %v1836
      %v1841 = vsub.f32 1.0, %v1837
      %v1842 = vsub.f32 1.0, %v1838
      %v1843 = vmul.f32 %v1707, %v1839
      %v1844 = vmul.f32 %v1708, %v1840
      %v1845 = vmul.f32 %v1709, %v1841
      %v1846 = vmul.f32 %v1710, %v1842
      %v1847 = vadd.f32 %v1843, 1.0
      %v1848 = vadd.f32 %v1844, 1.0
      %v1849 = vadd.f32 %v1845, 1.0
      %v1850 = vadd.f32 %v1846, 1.0
      %v1851 = vmul.f32 %v1695, %v1847
      %v1852 = vmul.f32 %v1696, %v1848
      %v1853 = vmul.f32 %v1697, %v1849
      %v1854 = vmul.f32 %v1698, %v1850
      %v1855 = vpack.c.bf16 %v1852, %v1851
      %v1856 = vpack.c.bf16 %v1854, %v1853
      %v1857 = vld [vmem:[%s623] sm:$0xf]
      %v1858 = vld [vmem:[%s623 + $0x4] sm:$0xf]
      %v1859 = vld [vmem:[%s623 + $0x8] sm:$0xf]
      %v1860 = vld [vmem:[%s623 + $0xc] sm:$0xf]
      %v1861 = vld [vmem:[%s623 + $0x10] sm:$0xf]
      %v1862 = vld [vmem:[%s623 + $0x14] sm:$0xf]
      %v1863 = vld [vmem:[%s623 + $0x18] sm:$0xf]
      %v1864 = vld [vmem:[%s623 + $0x1c] sm:$0xf]
      %v1873 = vunpack.c.l.b16 %v1857
      %v1874 = vunpack.c.l.b16 %v1858
      %v1875 = vunpack.c.l.b16 %v1859
      %v1876 = vunpack.c.l.b16 %v1860
      %v1877 = vunpack.c.l.b16 %v1861
      %v1878 = vunpack.c.l.b16 %v1862
      %v1879 = vunpack.c.l.b16 %v1863
      %v1880 = vunpack.c.l.b16 %v1864
      %v1881 = vpack.c.b16 %v1874, %v1873
      %v1882 = vpack.c.b16 %v1876, %v1875
      %v1883 = vpack.c.b16 %v1878, %v1877
      %v1884 = vpack.c.b16 %v1880, %v1879
      %vm1889 = vcmask 523264
      %v1891 = vsel %vm1889, %v1855, 0
      %v1894 = vsel %vm1889, %v1856, 0
      %1896 = vmatpush.bf16.msra.mxu0 0
      %1897 = vmatpush.bf16.msra.mxu0 0
      %1898 = vmatpush.bf16.msra.mxu0 0
      %1899 = vmatpush.bf16.msra.mxu0 0
      %1900 = vmatpush.bf16.msra.mxu0 %v1884
      %1901 = vmatpush.bf16.msra.mxu0 %v1883
      %1902 = vmatpush.bf16.msra.mxu0 %v1882
      %1903 = vmatpush.bf16.msra.mxu0 %v1881
      %1904 = vmatmul.bf16.gmra.mxu0 %v1891
      %v1905 = vpop.f32.mrf.mxu0
      %v1906 = vadd.f32 0.0, %v1905
      %v1907 = vpop.f32.mrf.mxu0
      %v1908 = vadd.f32 0.0, %v1907
      %1909 = vmatmul.bf16.gmra.mxu0 %v1894
      %v1910 = vpop.f32.mrf.mxu0
      %v1911 = vadd.f32 0.0, %v1910
      %v1912 = vpop.f32.mrf.mxu0
      %v1913 = vadd.f32 0.0, %v1912
      %1914 = vdwg.mxu0
      %v1915 = vadd.f32 %v1549, %v1906
      %v1916 = vadd.f32 %v1550, %v1908
      %v1917 = vadd.f32 %v1551, %v1911
      %v1918 = vadd.f32 %v1552, %v1913
      %v1919 = vperm.slane %v732, 5
      %v1920 = vadd.f32 %v1915, %v1919
      %v1921 = vadd.f32 %v1916, %v1919
      %v1922 = vadd.f32 %v1917, %v1919
      %v1923 = vadd.f32 %v1918, %v1919
      %1924 = vst.msk [vmem:[#allocation2] sm:$0xff] %vm733, %v1920
      %1925 = vst.msk [vmem:[#allocation2 + $0x8] sm:$0xff] %vm733, %v1921
      %1926 = vst.msk [vmem:[#allocation2 + $0x10] sm:$0xff] %vm733, %v1922
      %1927 = vst.msk [vmem:[#allocation2 + $0x18] sm:$0xff] %vm733, %v1923
      %p1928 = scmp.eq.s32.totalorder %s32, 1
      // Predicated region
      $region89: #{vit_forward.1} parent=83 // pred_check
        %p1929 = pneg %p1928
      $region90: #{vit_forward.1} parent=83 // pred_check_branch
        %1931 = sbr.rel (%p1929) target = $region92
      $region91: #{vit_forward.1} parent=83 // pred_region
        %v1932 = vpack.c.bf16 %v1921, %v1920
        %v1933 = vpack.c.bf16 %v1923, %v1922
        %v1934 = vld [vmem:[%s10] sm:$0xf]
        %v1935 = vld [vmem:[%s10 + $0x4] sm:$0xf]
        %v1936 = vld [vmem:[%s10 + $0x8] sm:$0xf]
        %v1937 = vld [vmem:[%s10 + $0xc] sm:$0xf]
        %v1938 = vld [vmem:[%s11] sm:$0x1]
        %v1940 = vperm.slane %v1938, 0
        %v1946 = vunpack.c.l.b16 %v1934
        %v1947 = vunpack.c.l.b16 %v1935
        %v1948 = vunpack.c.l.b16 %v1936
        %v1949 = vunpack.c.l.b16 %v1937
        %v1950 = vpack.c.b16 %v1947, %v1946
        %v1951 = vpack.c.b16 %v1949, %v1948
        %v1955 = vsel %vm733, %v1932, 0
        %v1958 = vsel %vm733, %v1933, 0
        %1960 = vmatpush.bf16.msra.mxu0 0
        %1961 = vmatpush.bf16.msra.mxu0 0
        %1962 = vmatpush.bf16.msra.mxu0 0
        %1963 = vmatpush.bf16.msra.mxu0 0
        %1964 = vmatpush.bf16.msra.mxu0 0
        %1965 = vmatpush.bf16.msra.mxu0 0
        %1966 = vmatpush.bf16.msra.mxu0 %v1951
        %1967 = vmatpush.bf16.msra.mxu0 %v1950
        %1968 = vmatmul.bf16.gmra.mxu0 %v1955
        %v1969 = vpop.f32.mrf.mxu0
        %v1970 = vadd.f32 %v1940, %v1969
        %v1971 = vpop.f32.mrf.mxu0
        %v1972 = vadd.f32 %v1940, %v1971
        %1973 = vmatmul.bf16.gmra.mxu0 %v1958
        %v1974 = vpop.f32.mrf.mxu0
        %v1975 = vadd.f32 %v1940, %v1974
        %v1976 = vpop.f32.mrf.mxu0
        %v1977 = vadd.f32 %v1940, %v1976
        %1978 = vdwg.mxu0
        %v1979 = vld [vmem:[%s12] sm:$0x1]
        %v1980 = vld [vmem:[%s13] sm:$0x1]
        %v1981 = vsel %vm1889, %v1970, 0.0
        %1982 = vadd.xlane.f32.xlu0 %v1981
        %v1983 = vpop.xlane.xlu0 %1982
        %v1984 = vsel %vm1889, %v1972, 0.0
        %1985 = vadd.xlane.f32.xlu0 %v1984
        %v1986 = vpop.xlane.xlu0 %1985
        %v1987 = vsel %vm1889, %v1975, 0.0
        %1988 = vadd.xlane.f32.xlu0 %v1987
        %v1989 = vpop.xlane.xlu0 %1988
        %v1990 = vsel %vm1889, %v1977, 0.0
        %1991 = vadd.xlane.f32.xlu0 %v1990
        %v1992 = vpop.xlane.xlu0 %1991
        %v1993 = vrcp.pop 64.0
        %v1994 = vmul.f32 64.0, %v1993
        %v1995 = vsub.f32 1.0, %v1994
        %v1996 = vmul.f32 %v1993, %v1995
        %v1997 = vadd.f32 %v1993, %v1996
        %vm1998 = vweird.f32 %v1993
        %v1999 = vsel %vm1998, %v1993, %v1997
        %v2000 = vmul.f32 %v1983, %v1999
        %v2001 = vmul.f32 %v1986, %v1999
        %v2002 = vmul.f32 %v1989, %v1999
        %v2003 = vmul.f32 %v1992, %v1999
        %v2004 = vsub.f32 %v1970, %v2000
        %v2005 = vsub.f32 %v1972, %v2001
        %v2006 = vsub.f32 %v1975, %v2002
        %v2007 = vsub.f32 %v1977, %v2003
        %v2008 = vmul.f32 %v2004, %v2004
        %v2009 = vmul.f32 %v2005, %v2005
        %v2010 = vmul.f32 %v2006, %v2006
        %v2011 = vmul.f32 %v2007, %v2007
        %v2012 = vsel %vm1889, %v2008, 0.0
        %2013 = vadd.xlane.f32.xlu0 %v2012
        %v2014 = vpop.xlane.xlu0 %2013
        %v2015 = vsel %vm1889, %v2009, 0.0
        %2016 = vadd.xlane.f32.xlu0 %v2015
        %v2017 = vpop.xlane.xlu0 %2016
        %v2018 = vsel %vm1889, %v2010, 0.0
        %2019 = vadd.xlane.f32.xlu0 %v2018
        %v2020 = vpop.xlane.xlu0 %2019
        %v2021 = vsel %vm1889, %v2011, 0.0
        %2022 = vadd.xlane.f32.xlu0 %v2021
        %v2023 = vpop.xlane.xlu0 %2022
        %v2024 = vmul.f32 %v2014, %v1999
        %v2025 = vmul.f32 %v2017, %v1999
        %v2026 = vmul.f32 %v2020, %v1999
        %v2027 = vmul.f32 %v2023, %v1999
        %v2028 = vadd.f32 %v2024, 1e-05
        %v2029 = vadd.f32 %v2025, 1e-05
        %v2030 = vadd.f32 %v2026, 1e-05
        %v2031 = vadd.f32 %v2027, 1e-05
        %v2032 = vrsqrt.pop %v2028
        %v2033 = vmul.f32 %v2032, %v2028
        %v2034 = vmul.f32 %v2033, %v2032
        %v2035 = vmul.f32 0.5, %v2034
        %v2036 = vsub.f32 1.5, %v2035
        %v2037 = vmul.f32 %v2032, %v2036
        %vm2038 = vweird.f32 %v2028
        %vm2039 = vweird.f32 %v2032
        %vm2040 = vmor %vm2038, %vm2039
        %v2041 = vsel %vm2040, %v2032, %v2037
        %v2042 = vrsqrt.pop %v2029
        %v2043 = vmul.f32 %v2042, %v2029
        %v2044 = vmul.f32 %v2043, %v2042
        %v2045 = vmul.f32 0.5, %v2044
        %v2046 = vsub.f32 1.5, %v2045
        %v2047 = vmul.f32 %v2042, %v2046
        %vm2048 = vweird.f32 %v2029
        %vm2049 = vweird.f32 %v2042
        %vm2050 = vmor %vm2048, %vm2049
        %v2051 = vsel %vm2050, %v2042, %v2047
        %v2052 = vrsqrt.pop %v2030
        %v2053 = vmul.f32 %v2052, %v2030
        %v2054 = vmul.f32 %v2053, %v2052
        %v2055 = vmul.f32 0.5, %v2054
        %v2056 = vsub.f32 1.5, %v2055
        %v2057 = vmul.f32 %v2052, %v2056
        %vm2058 = vweird.f32 %v2030
        %vm2059 = vweird.f32 %v2052
        %vm2060 = vmor %vm2058, %vm2059
        %v2061 = vsel %vm2060, %v2052, %v2057
        %v2062 = vrsqrt.pop %v2031
        %v2063 = vmul.f32 %v2062, %v2031
        %v2064 = vmul.f32 %v2063, %v2062
        %v2065 = vmul.f32 0.5, %v2064
        %v2066 = vsub.f32 1.5, %v2065
        %v2067 = vmul.f32 %v2062, %v2066
        %vm2068 = vweird.f32 %v2031
        %vm2069 = vweird.f32 %v2062
        %vm2070 = vmor %vm2068, %vm2069
        %v2071 = vsel %vm2070, %v2062, %v2067
        %v2072 = vmul.f32 %v2004, %v2041
        %v2073 = vmul.f32 %v2005, %v2051
        %v2074 = vmul.f32 %v2006, %v2061
        %v2075 = vmul.f32 %v2007, %v2071
        %v2077 = vperm.slane %v1979, 0
        %v2079 = vmul.f32 %v2072, %v2077
        %v2080 = vmul.f32 %v2073, %v2077
        %v2081 = vmul.f32 %v2074, %v2077
        %v2082 = vmul.f32 %v2075, %v2077
        %v2084 = vperm.slane %v1980, 0
        %v2086 = vadd.f32 %v2079, %v2084
        %v2087 = vadd.f32 %v2080, %v2084
        %v2088 = vadd.f32 %v2081, %v2084
        %v2089 = vadd.f32 %v2082, %v2084
        %v2090 = vpack.c.bf16 %v2087, %v2086
        %v2091 = vpack.c.bf16 %v2089, %v2088
        %v2092 = vld [vmem:[%s14] sm:$0xf]
        %v2093 = vld [vmem:[%s14 + $0x4] sm:$0xf]
        %v2094 = vld [vmem:[%s14 + $0x8] sm:$0xf]
        %v2095 = vld [vmem:[%s14 + $0xc] sm:$0xf]
        %v2096 = vld [vmem:[%s14 + $0x10] sm:$0xf]
        %v2097 = vld [vmem:[%s14 + $0x14] sm:$0xf]
        %v2098 = vld [vmem:[%s14 + $0x18] sm:$0xf]
        %v2099 = vld [vmem:[%s14 + $0x1c] sm:$0xf]
        %v2100 = vld [vmem:[%s15] sm:$0x1]
        %v2102 = vperm.slane %v2100, 0
        %v2112 = vunpack.c.l.b16 %v2092
        %v2113 = vunpack.c.l.b16 %v2093
        %v2114 = vunpack.c.l.b16 %v2094
        %v2115 = vunpack.c.l.b16 %v2095
        %v2116 = vunpack.c.l.b16 %v2096
        %v2117 = vunpack.c.l.b16 %v2097
        %v2118 = vunpack.c.l.b16 %v2098
        %v2119 = vunpack.c.l.b16 %v2099
        %v2120 = vpack.c.b16 %v2113, %v2112
        %v2121 = vpack.c.b16 %v2115, %v2114
        %v2122 = vpack.c.b16 %v2117, %v2116
        %v2123 = vpack.c.b16 %v2119, %v2118
        %v2129 = vsel %vm1889, %v2090, 0
        %v2132 = vsel %vm1889, %v2091, 0
        %2134 = vmatpush.bf16.msra.mxu0 0
        %2135 = vmatpush.bf16.msra.mxu0 0
        %2136 = vmatpush.bf16.msra.mxu0 0
        %2137 = vmatpush.bf16.msra.mxu0 0
        %2138 = vmatpush.bf16.msra.mxu0 %v2123
        %2139 = vmatpush.bf16.msra.mxu0 %v2122
        %2140 = vmatpush.bf16.msra.mxu0 %v2121
        %2141 = vmatpush.bf16.msra.mxu0 %v2120
        %2142 = vmatmul.bf16.gmra.mxu0 %v2129
        %v2143 = vpop.f32.mrf.mxu0
        %v2144 = vadd.f32 %v2102, %v2143
        %v2145 = vpop.f32.mrf.mxu0
        %v2146 = vadd.f32 %v2102, %v2145
        %2147 = vmatmul.bf16.gmra.mxu0 %v2132
        %v2148 = vpop.f32.mrf.mxu0
        %v2149 = vadd.f32 %v2102, %v2148
        %v2150 = vpop.f32.mrf.mxu0
        %v2151 = vadd.f32 %v2102, %v2150
        %2152 = vdwg.mxu0
        %2153 = vst.msk [vmem:[%s632] sm:$0xff] %vm1889, %v2144
        %2154 = vst.msk [vmem:[%s632 + $0x8] sm:$0xff] %vm1889, %v2146
        %2155 = vst.msk [vmem:[%s632 + $0x10] sm:$0xff] %vm1889, %v2149
        %2156 = vst.msk [vmem:[%s632 + $0x18] sm:$0xff] %vm1889, %v2151
      $region92: #{vit_forward.1} parent=83 // pred_fallthru
        _
      %s2157 = smul.u32 4, %s31
      %p2158 = scmp.lt.s32.totalorder %s2157, 3
      %s2159 = scalar_select %p2158, %s2157, 3
      %s2160 = smul.addr %s2159, 8
      %s2161 = scalar_lea.vmem %s16, %s2160
      // Predicated region
      $region93: #{vit_forward.1} parent=83 // pred_check
        %p2162 = pneg %p423
      $region94: #{vit_forward.1} parent=83 // pred_check_branch
        %2164 = sbr.rel (%p2162) target = $region96
      $region95: #{vit_forward.1} parent=83 // pred_region
        %s2165 = smul.u32 4, %s31
      $region96: #{vit_forward.1} parent=83 // pred_fallthru
        _
      // Predicated region
      $region97: #{vit_forward.1} parent=83 // pred_check
        %p2166 = pneg %p423
      $region98: #{vit_forward.1} parent=83 // pred_check_branch
        %2168 = sbr.rel (%p2166) target = $region100
      $region99: #{vit_forward.1} parent=83 // pred_region
        %s2169 = smul.u32 4, %s31
        %p2170 = scmp.lt.s32.totalorder %s2169, 3
        %s2171 = scalar_select %p2170, %s2169, 3
        %s2172 = smul.addr %s2171, 8
        %s2173 = scalar_lea.vmem %s16, %s2172
      $region100: #{vit_forward.1} parent=83 // pred_fallthru
        _
    $region84: #{vit_forward.1} parent=5 // pred_fallthru
      _
    %p2174 = scmp.le.s32.totalorder 2, %s22
    // Predicated region
    $region101: #{vit_forward.1} parent=5 // pred_check
      %p2175 = pneg %p2174
    $region102: #{vit_forward.1} parent=5 // pred_check_branch
      %2177 = sbr.rel (%p2175) target = $region104
    $region103: #{vit_forward.1} parent=5 // pred_region
      %s2178 = ssub.s32 %s22, 2
    $region104: #{vit_forward.1} parent=5 // pred_fallthru
      _
  $region6: #{vit_forward.1} parent=0 // loop_footer
    %s26 = sadd.s32 1, %s22
  $region7: #{vit_forward.1} parent=0 // loop_footer_branch
    %21 = sbr.rel target = $region3
  $region8: #{vit_forward.1} parent=0 // loop_exit
    _

</llo_original>
